<compile_context>
chip_gen: v7x
topology: tpu7x:2x2x1
jax: 0.10.0
libtpu: 0.0.40
codegen_flags: <defaults>
</compile_context>

<pallas_src>
import functools
import math

import jax
import jax.numpy as jnp
from jax.experimental import pallas as pl
from jax.experimental.pallas import tpu as pltpu


def _round_up(x, m):
    return ((x + m - 1) // m) * m


def _cdiv(a, b):
    return (a + b - 1) // b


def cross_attention_kernel(x_ref, w_ref, b_ref, out_ref, *, approx_recip):
    """One batch tile, batch-minor (lane-dense) layout.

    x_ref  : (2, H, TB)   [0] = graph^T tile, [1] = sequence^T tile (matmul dtype)
    w_ref  : (4*Hs, H)    rows = [wq^T | wk^T | wv^T | wfc^T], zero pad per section
    b_ref  : (4*Hs, 1)    matching biases (f32)
    out_ref: (Hs, TB)     fc output, transposed, f32 (rows >= H are zero)
    """
    f32 = jnp.float32
    Hs = w_ref.shape[0] // 4
    H = w_ref.shape[1]
    TB = x_ref.shape[-1]
    cdt = x_ref.dtype
    inv_scale = 1.0 / math.sqrt(float(H))

    # --- Fused Q/K/V projection: ONE MXU matmul over [graph | sequence] -------
    x_cat = jnp.concatenate([x_ref[0], x_ref[1]], axis=-1)            # (H, 2*TB)
    w_qkv = w_ref[0:3 * Hs, :]                                        # (3Hs, H)
    proj = jnp.dot(w_qkv, x_cat, preferred_element_type=f32)          # (3Hs, 2*TB)
    proj = proj + b_ref[0:3 * Hs, :]                                  # bias (lane bcast)

    q = proj[0 * Hs:0 * Hs + H, 0:TB]          # (H, TB)  from the graph half
    k = proj[1 * Hs:1 * Hs + H, TB:2 * TB]     # (H, TB)  from the sequence half
    v = proj[2 * Hs:2 * Hs + H, TB:2 * TB]     # (H, TB)  from the sequence half

    # --- Rank-1 softmax, batch-minor: every vreg uses all 128 lanes -----------
    ks = k * inv_scale                                                # (H, TB)
    # Exact row-max of energy[i, :, b] without touching the HxH tensor:
    kmax = jnp.max(ks, axis=0, keepdims=True)                         # (1, TB)
    kmin = jnp.min(ks, axis=0, keepdims=True)                         # (1, TB)
    m = jnp.where(q >= 0, q * kmax, q * kmin)                         # (H, TB)

    # energy laid out (j, i, b): reductions over j are cheap cross-vreg adds.
    energy = ks[:, None, :] * q[None, :, :]                           # (Hj, Hi, TB)
    e = jnp.exp(energy - m[None, :, :])                               # (Hj, Hi, TB) f32
    denom = jnp.sum(e, axis=0)                                        # (Hi, TB)
    numer = jnp.sum(e * v[:, None, :], axis=0)                        # (Hi, TB) attn@V on VPU
    weighted = numer * pl.reciprocal(denom, approx=approx_recip)      # (Hi, TB)

    # --- Final projection -> lane-dense (Hs, TB) output (unmasked stores) -----
    # (Dropout is identity in eval mode.)
    w_fc = w_ref[3 * Hs:, :]                                          # (Hs, H)
    out = jnp.dot(w_fc, weighted.astype(cdt), preferred_element_type=f32)
    out_ref[...] = (out + b_ref[3 * Hs:, :]).astype(out_ref.dtype)


def pack_params(params, matmul_dtype=jnp.bfloat16):
    """Build the packed, transposed weight/bias slabs ONCE (hoisted off the call path)."""
    f32 = jnp.float32
    H = params["wq"].shape[0]
    Hs = _round_up(H, 8)

    w_all = jnp.zeros((4 * Hs, H), f32)
    b_all = jnp.zeros((4 * Hs, 1), f32)
    for idx, (wname, bname) in enumerate(
            (("wq", "bq"), ("wk", "bk"), ("wv", "bv"), ("wfc", "bfc"))):
        w_all = w_all.at[idx * Hs:idx * Hs + H, :].set(params[wname].T.astype(f32))
        b_all = b_all.at[idx * Hs:idx * Hs + H, :].set(
            jnp.reshape(params[bname], (H, 1)).astype(f32))
    return {"w_all_t": w_all.astype(matmul_dtype), "b_all_t": b_all, "hidden": H}


def cross_attention_block(graph_feature, sequence_feature, params, *,
                          matmul_dtype=jnp.bfloat16, block_b=None):
    f32 = jnp.float32
    B, H = graph_feature.shape

    packed = params if "w_all_t" in params else pack_params(params, matmul_dtype)
    w_all, b_all = packed["w_all_t"], packed["b_all_t"]
    cdt = w_all.dtype
    Hs = w_all.shape[0] // 4
    assert w_all.shape[1] == H

    # Batch tile = lane axis of every in-kernel tensor (multiple of 128).
    if block_b is None:
        b128 = _round_up(B, 128)
        block_b = min(512, max(128, _round_up(_cdiv(b128, 2), 128)))  # >=2 grid steps when B > 128
    TB = max(128, (int(block_b) // 128) * 128)
    B_pad = _round_up(B, TB)

    # Stack graph/sequence batch-minor so one BlockSpec delivers a single
    # lane-dense activation stream per grid step.
    x = jnp.stack([graph_feature.T, sequence_feature.T], axis=0).astype(cdt)  # (2, H, B)
    if B_pad != B:
        x = jnp.pad(x, ((0, 0), (0, 0), (0, B_pad - B)))

    kernel = functools.partial(cross_attention_kernel,
                               approx_recip=(jnp.dtype(cdt).itemsize < 4))

    # VMEM need ~ a few (H, H, TB) f32 temporaries + tiny parameter slabs.
    vmem_bytes = int(min(48 * 1024 * 1024, 8 * 1024 * 1024 + 8 * TB * H * H * 4))

    out_t = pl.pallas_call(
        kernel,
        out_shape=jax.ShapeDtypeStruct((Hs, B_pad), f32),
        grid=(B_pad // TB,),
        in_specs=[
            pl.BlockSpec((2, H, TB), lambda i: (0, 0, i)),   # activations (batch tile)
            pl.BlockSpec((4 * Hs, H), lambda i: (0, 0)),     # weight slab: VMEM-resident
            pl.BlockSpec((4 * Hs, 1), lambda i: (0, 0)),     # bias slab:   VMEM-resident
        ],
        out_specs=pl.BlockSpec((Hs, TB), lambda i: (0, i)),
        compiler_params=pltpu.CompilerParams(
            dimension_semantics=("parallel",),
            vmem_limit_bytes=vmem_bytes,
        ),
    )(x, w_all, b_all)

    return out_t[:H, :B].T


def init_params(key, hidden):
    ks = jax.random.split(key, 8)
    bound = 1.0 / math.sqrt(hidden)

    def w(k):
        return jax.random.uniform(k, (hidden, hidden), jnp.float32, -bound, bound)

    def b(k):
        return jax.random.uniform(k, (1, hidden), jnp.float32, -bound, bound)

    return {
        "wq": w(ks[0]), "bq": b(ks[1]),
        "wk": w(ks[2]), "bk": b(ks[3]),
        "wv": w(ks[4]), "bv": b(ks[5]),
        "wfc": w(ks[6]), "bfc": b(ks[7]),
    }


def reference(graph_feature, sequence_feature, params, matmul_dtype=jnp.float32):
    """Pure-JAX reference of the PyTorch forward (eval mode, mask=None)."""
    f32 = jnp.float32
    g = graph_feature.astype(matmul_dtype)
    s = sequence_feature.astype(matmul_dtype)
    wq = params["wq"].astype(matmul_dtype)
    wk = params["wk"].astype(matmul_dtype)
    wv = params["wv"].astype(matmul_dtype)
    wfc = params["wfc"].astype(matmul_dtype)
    q = jnp.dot(g, wq, preferred_element_type=f32) + params["bq"]
    k = jnp.dot(s, wk, preferred_element_type=f32) + params["bk"]
    v = jnp.dot(s, wv, preferred_element_type=f32) + params["bv"]
    H = q.shape[-1]
    energy = (q[:, :, None] * k[:, None, :]) / jnp.sqrt(jnp.float32(H))
    attn = jax.nn.softmax(energy, axis=-1)
    w = jnp.einsum("bij,bj->bi", attn, v)
    return jnp.dot(w.astype(matmul_dtype), wfc,
                   preferred_element_type=f32) + params["bfc"]


if __name__ == "__main__":
    B, HIDDEN = 2, 32

    key = jax.random.PRNGKey(0)
    k_g, k_s, k_p = jax.random.split(key, 3)
    graph_feature = jax.random.normal(k_g, (B, HIDDEN), jnp.float32)
    sequence_feature = jax.random.normal(k_s, (B, HIDDEN), jnp.float32)
    params = init_params(k_p, HIDDEN)

    # Exact-precision path: packed slabs built once (hoisted), f32 matmuls.
    packed_f32 = pack_params(params, matmul_dtype=jnp.float32)
    out_f32 = cross_attention_block(graph_feature, sequence_feature, packed_f32)
    out_f32 = jax.block_until_ready(out_f32)
    ref_f32 = reference(graph_feature, sequence_feature, params,
                        matmul_dtype=jnp.float32)
    assert out_f32.shape == (B, HIDDEN)
    assert jnp.allclose(out_f32, ref_f32, atol=5e-4, rtol=5e-4), \
        "f32 kernel mismatch vs reference"

    # Performance path: bf16 matmul operands (f32 accumulation, f32 softmax).
    packed_bf16 = pack_params(params, matmul_dtype=jnp.bfloat16)
    out_bf16 = cross_attention_block(graph_feature, sequence_feature, packed_bf16)
    out_bf16 = jax.block_until_ready(out_bf16)
    ref_bf16 = reference(graph_feature, sequence_feature, params,
                         matmul_dtype=jnp.bfloat16)
    assert out_bf16.shape == (B, HIDDEN)
    assert jnp.allclose(out_bf16, ref_bf16, atol=2e-2, rtol=2e-2), \
        "bf16 kernel mismatch vs bf16 reference"

    print("KERNEL_OK")
</pallas_src>

<mosaic_0001>
module attributes {stable_mosaic.version = 11 : i64} {
  func.func @cross_attention_kernel(%arg0: i32, %arg1: memref<2x32x128xf32, #tpu.memory_space<vmem>>, %arg2: memref<128x32xf32, #tpu.memory_space<vmem>>, %arg3: memref<128x1xf32, #tpu.memory_space<vmem>>, %arg4: memref<32x128xf32, #tpu.memory_space<vmem>>) attributes {dimension_semantics = [#tpu.dimension_semantics<parallel>], iteration_bounds = array<i64: 1>, scalar_prefetch = 0 : i64, scratch_operands = 0 : i64, tpu.core_type = #tpu.core_type<tc>, window_params = [{transform_indices = @transform_0, window_bounds = array<i64: 2, 32, 128>}, {pipeline_mode = #tpu.pipeline_mode<synchronous>, transform_indices = @transform_1, window_bounds = array<i64: 128, 32>}, {pipeline_mode = #tpu.pipeline_mode<synchronous>, transform_indices = @transform_2, window_bounds = array<i64: 128, 1>}, {transform_indices = @transform_3, window_bounds = array<i64: 32, 128>}]} {
    %c0 = arith.constant 0 : index
    %c0_0 = arith.constant 0 : index
    %c0_1 = arith.constant 0 : index
    %0 = vector.load %arg1[%c0, %c0_0, %c0_1] : memref<2x32x128xf32, #tpu.memory_space<vmem>>, vector<1x32x128xf32>
    %1 = vector.shape_cast %0 : vector<1x32x128xf32> to vector<32x128xf32>
    %c1 = arith.constant 1 : index
    %c0_2 = arith.constant 0 : index
    %c0_3 = arith.constant 0 : index
    %2 = vector.load %arg1[%c1, %c0_2, %c0_3] : memref<2x32x128xf32, #tpu.memory_space<vmem>>, vector<1x32x128xf32>
    %3 = vector.shape_cast %2 : vector<1x32x128xf32> to vector<32x128xf32>
    %4 = tpu.concatenate %1, %3 in 1 : vector<32x128xf32>, vector<32x128xf32> -> vector<32x256xf32>
    %c0_4 = arith.constant 0 : index
    %c0_5 = arith.constant 0 : index
    %5 = vector.load %arg2[%c0_4, %c0_5] : memref<128x32xf32, #tpu.memory_space<vmem>>, vector<96x32xf32>
    %cst = arith.constant dense<0.000000e+00> : vector<96x256xf32>
    %6 = tpu.matmul %5, %4, %cst {dimension_numbers = #tpu.dot_dimension_numbers<[1], [0], [0], [1], [0, 0, 1, 1], [], []>} : vector<96x32xf32>, vector<32x256xf32>, vector<96x256xf32> -> vector<96x256xf32>
    %c0_6 = arith.constant 0 : index
    %c0_7 = arith.constant 0 : index
    %7 = vector.load %arg3[%c0_6, %c0_7] : memref<128x1xf32, #tpu.memory_space<vmem>>, vector<96x1xf32>
    %8 = vector.broadcast %7 : vector<96x1xf32> to vector<96x256xf32>
    %9 = arith.addf %6, %8 : vector<96x256xf32>
    %10 = vector.extract_strided_slice %9 {offsets = [0, 0], sizes = [32, 128], strides = [1, 1]} : vector<96x256xf32> to vector<32x128xf32>
    %11 = vector.extract_strided_slice %9 {offsets = [32, 128], sizes = [32, 128], strides = [1, 1]} : vector<96x256xf32> to vector<32x128xf32>
    %12 = vector.extract_strided_slice %9 {offsets = [64, 128], sizes = [32, 128], strides = [1, 1]} : vector<96x256xf32> to vector<32x128xf32>
    %cst_8 = arith.constant 0.176776692 : f32
    %13 = vector.broadcast %cst_8 : f32 to vector<32x128xf32>
    %14 = arith.mulf %11, %13 : vector<32x128xf32>
    %cst_9 = arith.constant dense<0xFF800000> : vector<128xf32>
    %15 = vector.multi_reduction <maximumf>, %14, %cst_9 [0] : vector<32x128xf32> to vector<128xf32>
    %16 = vector.shape_cast %15 : vector<128xf32> to vector<1x128xf32>
    %cst_10 = arith.constant dense<0x7F800000> : vector<128xf32>
    %17 = vector.multi_reduction <minimumf>, %14, %cst_10 [0] : vector<32x128xf32> to vector<128xf32>
    %18 = vector.shape_cast %17 : vector<128xf32> to vector<1x128xf32>
    %cst_11 = arith.constant 0.000000e+00 : f32
    %19 = vector.broadcast %cst_11 : f32 to vector<32x128xf32>
    %20 = arith.cmpf oge, %10, %19 : vector<32x128xf32>
    %21 = vector.broadcast %16 : vector<1x128xf32> to vector<32x128xf32>
    %22 = arith.mulf %10, %21 : vector<32x128xf32>
    %23 = vector.broadcast %18 : vector<1x128xf32> to vector<32x128xf32>
    %24 = arith.mulf %10, %23 : vector<32x128xf32>
    %25 = arith.select %20, %22, %24 : vector<32x128xi1>, vector<32x128xf32>
    %26 = vector.shape_cast %14 : vector<32x128xf32> to vector<32x1x128xf32>
    %27 = vector.shape_cast %10 : vector<32x128xf32> to vector<1x32x128xf32>
    %28 = vector.broadcast %26 : vector<32x1x128xf32> to vector<32x32x128xf32>
    %29 = vector.broadcast %27 : vector<1x32x128xf32> to vector<32x32x128xf32>
    %30 = arith.mulf %28, %29 : vector<32x32x128xf32>
    %31 = vector.shape_cast %25 : vector<32x128xf32> to vector<1x32x128xf32>
    %32 = vector.broadcast %31 : vector<1x32x128xf32> to vector<32x32x128xf32>
    %33 = arith.subf %30, %32 : vector<32x32x128xf32>
    %34 = math.exp %33 : vector<32x32x128xf32>
    %cst_12 = arith.constant dense<0.000000e+00> : vector<32x128xf32>
    %35 = vector.multi_reduction <add>, %34, %cst_12 [0] : vector<32x32x128xf32> to vector<32x128xf32>
    %36 = vector.shape_cast %12 : vector<32x128xf32> to vector<32x1x128xf32>
    %37 = vector.broadcast %36 : vector<32x1x128xf32> to vector<32x32x128xf32>
    %38 = arith.mulf %34, %37 : vector<32x32x128xf32>
    %cst_13 = arith.constant dense<0.000000e+00> : vector<32x128xf32>
    %39 = vector.multi_reduction <add>, %38, %cst_13 [0] : vector<32x32x128xf32> to vector<32x128xf32>
    %40 = tpu.reciprocal %35 : vector<32x128xf32> -> vector<32x128xf32>
    %41 = arith.mulf %39, %40 : vector<32x128xf32>
    %c96 = arith.constant 96 : index
    %c0_14 = arith.constant 0 : index
    %42 = vector.load %arg2[%c96, %c0_14] : memref<128x32xf32, #tpu.memory_space<vmem>>, vector<32x32xf32>
    %cst_15 = arith.constant dense<0.000000e+00> : vector<32x128xf32>
    %43 = tpu.matmul %42, %41, %cst_15 {dimension_numbers = #tpu.dot_dimension_numbers<[1], [0], [0], [1], [0, 0, 1, 1], [], []>} : vector<32x32xf32>, vector<32x128xf32>, vector<32x128xf32> -> vector<32x128xf32>
    %c96_16 = arith.constant 96 : index
    %c0_17 = arith.constant 0 : index
    %44 = vector.load %arg3[%c96_16, %c0_17] : memref<128x1xf32, #tpu.memory_space<vmem>>, vector<32x1xf32>
    %45 = vector.broadcast %44 : vector<32x1xf32> to vector<32x128xf32>
    %46 = arith.addf %43, %45 : vector<32x128xf32>
    %c0_18 = arith.constant 0 : index
    %c0_19 = arith.constant 0 : index
    %47 = vector.load %arg4[%c0_18, %c0_19] : memref<32x128xf32, #tpu.memory_space<vmem>>, vector<32x128xf32>
    tpu.vector_store %arg4[%c0_18, %c0_19], %46 {strides = array<i32>} : memref<32x128xf32, #tpu.memory_space<vmem>>, vector<32x128xf32>,
    return
  }
  func.func @transform_0(%arg0: i32) -> (i32, i32, i32) {
    %c0_i32 = arith.constant 0 : i32
    %c0_i32_0 = arith.constant 0 : i32
    %c0_i32_1 = arith.constant 0 : i32
    return %c0_i32, %c0_i32_0, %arg0 : i32, i32, i32
  }
  func.func @transform_1(%arg0: i32) -> (i32, i32) {
    %c0_i32 = arith.constant 0 : i32
    %c0_i32_0 = arith.constant 0 : i32
    %c0_i32_1 = arith.constant 0 : i32
    return %c0_i32, %c0_i32_0 : i32, i32
  }
  func.func @transform_2(%arg0: i32) -> (i32, i32) {
    %c0_i32 = arith.constant 0 : i32
    %c0_i32_0 = arith.constant 0 : i32
    %c0_i32_1 = arith.constant 0 : i32
    return %c0_i32, %c0_i32_0 : i32, i32
  }
  func.func @transform_3(%arg0: i32) -> (i32, i32) {
    %c0_i32 = arith.constant 0 : i32
    %c0_i32_0 = arith.constant 0 : i32
    return %c0_i32, %arg0 : i32, i32
  }
}

</mosaic_0001>

<llo_original>
// kernel: tpu_custom_call.1
$region0: #{tpu_custom_call.1}
  #allocation0 [shape = 'u32[]', space=smem, size = 0x4, offset = 0x4, fixed_abs, tag = 'smem constant byte address 0x4 - core index']
  #allocation1 [shape = 'u32[144,128]{1,0:T(1,128)}', space=vmem, size = 0x12000, scoped, tag = 'internal scratch']
  %s0 = inlined_call_operand.vmem [shape: f32[2,32,128], index: 0, kind: input, shape index: {}]
  %s1 = inlined_call_operand.vmem [shape: f32[128,32], index: 1, kind: input, shape index: {}]
  %s2 = inlined_call_operand.vmem [shape: f32[128,1], index: 2, kind: input, shape index: {}]
  %s3 = inlined_call_operand.hbm [shape: f32[32,128], index: 3, kind: output, shape index: {}]
  %s4 = sld [smem:[#allocation0]]
  $region22: #{tpu_custom_call.1} parent=0
    _
  %s6 = ssub.s32 1, %s4
  %s7 = scalar_select 0, %s6, %s4
  $region1: #{tpu_custom_call.1} parent=0
    #allocation2 [shape = 'u8[16384]{0}', space=vmem, size = 0x4000, scoped, tag = 'output window, operand 0, single buffered']
    #allocation3 [shape = 's32[1]{0}', space=sflag, size = 0x4, scoped, tag = 'scoped memory for tpu_custom_call.1']
    %8 = vsyncpa [#allocation3], 0
    // Predicated region
    $region2: #{tpu_custom_call.1} parent=1 // pred_check
      _
    $region3: #{tpu_custom_call.1} parent=1 // pred_check_branch
      %10 = sbr.rel (0) target = $region5
    $region4: #{tpu_custom_call.1} parent=1 // pred_region
      _
    $region5: #{tpu_custom_call.1} parent=1 // pred_fallthru
      _
    // Predicated region
    $region6: #{tpu_custom_call.1} parent=1 // pred_check
      _
    $region7: #{tpu_custom_call.1} parent=1 // pred_check_branch
      %12 = sbr.rel (0) target = $region9
    $region8: #{tpu_custom_call.1} parent=1 // pred_region
      _
    $region9: #{tpu_custom_call.1} parent=1 // pred_fallthru
      _
    // Predicated region
    $region10: #{tpu_custom_call.1} parent=1 // pred_check
      _
    $region11: #{tpu_custom_call.1} parent=1 // pred_check_branch
      %14 = sbr.rel (0) target = $region13
    $region12: #{tpu_custom_call.1} parent=1 // pred_region
      _
    $region13: #{tpu_custom_call.1} parent=1 // pred_fallthru
      _
    %v15 = vld [vmem:[%s0] sm:$0xff]
    %v16 = vld [vmem:[%s0 + $0x8] sm:$0xff]
    %v17 = vld [vmem:[%s0 + $0x10] sm:$0xff]
    %v18 = vld [vmem:[%s0 + $0x18] sm:$0xff]
    %s19 = scalar_lea.vmem %s0, 32
    %v20 = vld [vmem:[%s19] sm:$0xff]
    %v21 = vld [vmem:[%s19 + $0x8] sm:$0xff]
    %v22 = vld [vmem:[%s19 + $0x10] sm:$0xff]
    %v23 = vld [vmem:[%s19 + $0x18] sm:$0xff]
    %v24 = vld [vmem:[%s1] sm:$0xff]
    %v25 = vld [vmem:[%s1 + $0x8] sm:$0xff]
    %v26 = vld [vmem:[%s1 + $0x10] sm:$0xff]
    %v27 = vld [vmem:[%s1 + $0x18] sm:$0xff]
    %v28 = vld [vmem:[%s1 + $0x20] sm:$0xff]
    %v29 = vld [vmem:[%s1 + $0x28] sm:$0xff]
    %v30 = vld [vmem:[%s1 + $0x30] sm:$0xff]
    %v31 = vld [vmem:[%s1 + $0x38] sm:$0xff]
    %v32 = vld [vmem:[%s1 + $0x40] sm:$0xff]
    %v33 = vld [vmem:[%s1 + $0x48] sm:$0xff]
    %v34 = vld [vmem:[%s1 + $0x50] sm:$0xff]
    %v35 = vld [vmem:[%s1 + $0x58] sm:$0xff]
    %v36 = vld [vmem:[%s2] sm:$0xff]
    %v37 = vld [vmem:[%s2 + $0x8] sm:$0xff]
    %v38 = vld [vmem:[%s2 + $0x10] sm:$0xff]
    %v39 = vld [vmem:[%s2 + $0x18] sm:$0xff]
    %v40 = vld [vmem:[%s2 + $0x20] sm:$0xff]
    %v41 = vld [vmem:[%s2 + $0x28] sm:$0xff]
    %v42 = vld [vmem:[%s2 + $0x30] sm:$0xff]
    %v43 = vld [vmem:[%s2 + $0x38] sm:$0xff]
    %v44 = vld [vmem:[%s2 + $0x40] sm:$0xff]
    %v45 = vld [vmem:[%s2 + $0x48] sm:$0xff]
    %v46 = vld [vmem:[%s2 + $0x50] sm:$0xff]
    %v47 = vld [vmem:[%s2 + $0x58] sm:$0xff]
    %49 = vset.pattern.permute.xlu0 0
    %50 = vperm.xlu0 %49, %v36
    %v51 = vpop.permute.xlu0 %50
    %54 = vset.pattern.permute.xlu0 0
    %55 = vperm.xlu0 %54, %v37
    %v56 = vpop.permute.xlu0 %55
    %59 = vset.pattern.permute.xlu0 0
    %60 = vperm.xlu0 %59, %v38
    %v61 = vpop.permute.xlu0 %60
    %64 = vset.pattern.permute.xlu0 0
    %65 = vperm.xlu0 %64, %v39
    %v66 = vpop.permute.xlu0 %65
    %69 = vset.pattern.permute.xlu0 0
    %70 = vperm.xlu0 %69, %v40
    %v71 = vpop.permute.xlu0 %70
    %74 = vset.pattern.permute.xlu0 0
    %75 = vperm.xlu0 %74, %v41
    %v76 = vpop.permute.xlu0 %75
    %79 = vset.pattern.permute.xlu0 0
    %80 = vperm.xlu0 %79, %v42
    %v81 = vpop.permute.xlu0 %80
    %84 = vset.pattern.permute.xlu0 0
    %85 = vperm.xlu0 %84, %v43
    %v86 = vpop.permute.xlu0 %85
    %89 = vset.pattern.permute.xlu0 0
    %90 = vperm.xlu0 %89, %v44
    %v91 = vpop.permute.xlu0 %90
    %94 = vset.pattern.permute.xlu0 0
    %95 = vperm.xlu0 %94, %v45
    %v96 = vpop.permute.xlu0 %95
    %99 = vset.pattern.permute.xlu0 0
    %100 = vperm.xlu0 %99, %v46
    %v101 = vpop.permute.xlu0 %100
    %104 = vset.pattern.permute.xlu0 0
    %105 = vperm.xlu0 %104, %v47
    %v106 = vpop.permute.xlu0 %105
    %vm108 = vcmask 261120
    %v110 = vsel %vm108, %v24, 0
    %v113 = vsel %vm108, %v25, 0
    %v116 = vsel %vm108, %v26, 0
    %v119 = vsel %vm108, %v27, 0
    %v122 = vsel %vm108, %v28, 0
    %v125 = vsel %vm108, %v29, 0
    %v128 = vsel %vm108, %v30, 0
    %v131 = vsel %vm108, %v31, 0
    %v134 = vsel %vm108, %v32, 0
    %v137 = vsel %vm108, %v33, 0
    %v140 = vsel %vm108, %v34, 0
    %v143 = vsel %vm108, %v35, 0
    %145 = vmatprep.subr.mxu0 %v20
    %146 = vmatpush1.msra.mxu0 %v15
    %147 = vmatprep.subr.mxu0 %v21
    %148 = vmatpush1.msra.mxu0 %v16
    %149 = vmatprep.subr.mxu0 %v22
    %150 = vmatpush1.msra.mxu0 %v17
    %151 = vmatprep.subr.mxu0 %v23
    %152 = vmatpush1.msra.mxu0 %v18
    %153 = vmatprep.subr.mxu0 0.0
    %154 = vmatpush1.msra.mxu0 0.0
    %155 = vmatprep.subr.mxu0 0.0
    %156 = vmatpush1.msra.mxu0 0.0
    %157 = vmatprep.subr.mxu0 0.0
    %158 = vmatpush1.msra.mxu0 0.0
    %159 = vmatprep.subr.mxu0 0.0
    %160 = vmatpush1.msra.mxu0 0.0
    %161 = vmatprep.subr.mxu0 0.0
    %162 = vmatpush1.msra.mxu0 0.0
    %163 = vmatprep.subr.mxu0 0.0
    %164 = vmatpush1.msra.mxu0 0.0
    %165 = vmatprep.subr.mxu0 0.0
    %166 = vmatpush1.msra.mxu0 0.0
    %167 = vmatprep.subr.mxu0 0.0
    %168 = vmatpush1.msra.mxu0 0.0
    %169 = vmatprep.subr.mxu0 0.0
    %170 = vmatpush1.msra.mxu0 0.0
    %171 = vmatprep.subr.mxu0 0.0
    %172 = vmatpush1.msra.mxu0 0.0
    %173 = vmatprep.subr.mxu0 0.0
    %174 = vmatpush1.msra.mxu0 0.0
    %175 = vmatprep.subr.mxu0 0.0
    %176 = vmatpush1.msra.mxu0 0.0
    %177 = vmatprep.subr.mxu0 0.0
    %178 = vmatpush1.msra.mxu0 0.0
    %179 = vmatprep.subr.mxu0 0.0
    %180 = vmatpush1.msra.mxu0 0.0
    %181 = vmatprep.subr.mxu0 0.0
    %182 = vmatpush1.msra.mxu0 0.0
    %183 = vmatprep.subr.mxu0 0.0
    %184 = vmatpush1.msra.mxu0 0.0
    %185 = vmatprep.subr.mxu0 0.0
    %186 = vmatpush1.msra.mxu0 0.0
    %187 = vmatprep.subr.mxu0 0.0
    %188 = vmatpush1.msra.mxu0 0.0
    %189 = vmatprep.subr.mxu0 0.0
    %190 = vmatpush1.msra.mxu0 0.0
    %191 = vmatprep.subr.mxu0 0.0
    %192 = vmatpush1.msra.mxu0 0.0
    %193 = vmatprep.subr.mxu0 0.0
    %194 = vmatpush1.msra.mxu0 0.0
    %195 = vmatprep.subr.mxu0 0.0
    %196 = vmatpush1.msra.mxu0 0.0
    %197 = vmatprep.subr.mxu0 0.0
    %198 = vmatpush1.msra.mxu0 0.0
    %199 = vmatprep.subr.mxu0 0.0
    %200 = vmatpush1.msra.mxu0 0.0
    %201 = vmatprep.subr.mxu0 0.0
    %202 = vmatpush1.msra.mxu0 0.0
    %203 = vmatprep.subr.mxu0 0.0
    %204 = vmatpush1.msra.mxu0 0.0
    %205 = vmatprep.subr.mxu0 0.0
    %206 = vmatpush1.msra.mxu0 0.0
    %207 = vmatprep.subr.mxu0 0.0
    %208 = vmatpush1.msra.mxu0 0.0
    %209 = vmatprep.mubr.f32.mxu0 0.0
    %210 = vmatmul.mubr.f32.gmra.mrb[0].mxu0 %v110
    %v211 = vpop.f32.mrb[0].mxu0
    %v212 = vadd.f32 %v51, %v211
    %v213 = vpop.f32.mrb[0].mxu0
    %214 = vmatprep.mubr.f32.mxu0 0.0
    %215 = vmatmul.mubr.f32.gmra.mrb[0].mxu0 %v113
    %v216 = vpop.f32.mrb[0].mxu0
    %v217 = vadd.f32 %v56, %v216
    %v218 = vpop.f32.mrb[0].mxu0
    %219 = vmatprep.mubr.f32.mxu0 0.0
    %220 = vmatmul.mubr.f32.gmra.mrb[0].mxu0 %v116
    %v221 = vpop.f32.mrb[0].mxu0
    %v222 = vadd.f32 %v61, %v221
    %v223 = vpop.f32.mrb[0].mxu0
    %224 = vmatprep.mubr.f32.mxu0 0.0
    %225 = vmatmul.mubr.f32.gmra.mrb[0].mxu0 %v119
    %v226 = vpop.f32.mrb[0].mxu0
    %v227 = vadd.f32 %v66, %v226
    %v228 = vpop.f32.mrb[0].mxu0
    %229 = vmatprep.mubr.f32.mxu0 0.0
    %230 = vmatmul.mubr.f32.gmra.mrb[0].mxu0 %v122
    %v231 = vpop.f32.mrb[0].mxu0
    %v232 = vpop.f32.mrb[0].mxu0
    %v233 = vadd.f32 %v71, %v232
    %234 = vmatprep.mubr.f32.mxu0 0.0
    %235 = vmatmul.mubr.f32.gmra.mrb[0].mxu0 %v125
    %v236 = vpop.f32.mrb[0].mxu0
    %v237 = vpop.f32.mrb[0].mxu0
    %v238 = vadd.f32 %v76, %v237
    %239 = vmatprep.mubr.f32.mxu0 0.0
    %240 = vmatmul.mubr.f32.gmra.mrb[0].mxu0 %v128
    %v241 = vpop.f32.mrb[0].mxu0
    %v242 = vpop.f32.mrb[0].mxu0
    %v243 = vadd.f32 %v81, %v242
    %244 = vmatprep.mubr.f32.mxu0 0.0
    %245 = vmatmul.mubr.f32.gmra.mrb[0].mxu0 %v131
    %v246 = vpop.f32.mrb[0].mxu0
    %v247 = vpop.f32.mrb[0].mxu0
    %v248 = vadd.f32 %v86, %v247
    %249 = vmatprep.mubr.f32.mxu0 0.0
    %250 = vmatmul.mubr.f32.gmra.mrb[0].mxu0 %v134
    %v251 = vpop.f32.mrb[0].mxu0
    %v252 = vpop.f32.mrb[0].mxu0
    %v253 = vadd.f32 %v91, %v252
    %254 = vmatprep.mubr.f32.mxu0 0.0
    %255 = vmatmul.mubr.f32.gmra.mrb[0].mxu0 %v137
    %v256 = vpop.f32.mrb[0].mxu0
    %v257 = vpop.f32.mrb[0].mxu0
    %v258 = vadd.f32 %v96, %v257
    %259 = vmatprep.mubr.f32.mxu0 0.0
    %260 = vmatmul.mubr.f32.gmra.mrb[0].mxu0 %v140
    %v261 = vpop.f32.mrb[0].mxu0
    %v262 = vpop.f32.mrb[0].mxu0
    %v263 = vadd.f32 %v101, %v262
    %264 = vmatprep.mubr.f32.mxu0 0.0
    %265 = vmatmul.mubr.f32.gmra.mrb[0].mxu0 %v143
    %v266 = vpop.f32.mrb[0].mxu0
    %v267 = vpop.f32.mrb[0].mxu0
    %v268 = vadd.f32 %v106, %v267
    %269 = vdwg.mxu0
    %v270 = vmul.f32 %v233, 0.17677669
    %v271 = vmul.f32 %v238, 0.17677669
    %v272 = vmul.f32 %v243, 0.17677669
    %v273 = vmul.f32 %v248, 0.17677669
    %v274 = vmax.f32 %v270, %v271
    %v275 = vmax.f32 %v272, %v273
    %v276 = vmax.f32 %v274, %v275
    %v277 = vrot.slane %v276, 4
    %v278 = vmax.f32 %v276, %v277
    %v279 = vrot.slane %v278, 2
    %v280 = vmax.f32 %v278, %v279
    %v281 = vrot.slane %v280, 1
    %v282 = vmax.f32 %v280, %v281
    %v283 = vmin.f32 %v270, %v271
    %v284 = vmin.f32 %v272, %v273
    %v285 = vmin.f32 %v283, %v284
    %v286 = vrot.slane %v285, 4
    %v287 = vmin.f32 %v285, %v286
    %v288 = vrot.slane %v287, 2
    %v289 = vmin.f32 %v287, %v288
    %v290 = vrot.slane %v289, 1
    %v291 = vmin.f32 %v289, %v290
    %vm292 = vcmp.ge.f32.partialorder %v212, 0.0
    %vm293 = vcmp.ge.f32.partialorder %v217, 0.0
    %vm294 = vcmp.ge.f32.partialorder %v222, 0.0
    %vm295 = vcmp.ge.f32.partialorder %v227, 0.0
    %v296 = vmul.f32 %v212, %v282
    %v297 = vmul.f32 %v217, %v282
    %v298 = vmul.f32 %v222, %v282
    %v299 = vmul.f32 %v227, %v282
    %v300 = vmul.f32 %v212, %v291
    %v301 = vmul.f32 %v217, %v291
    %v302 = vmul.f32 %v222, %v291
    %v303 = vmul.f32 %v227, %v291
    %v304 = vsel %vm292, %v296, %v300
    %v305 = vsel %vm293, %v297, %v301
    %v306 = vsel %vm294, %v298, %v302
    %v307 = vsel %vm295, %v299, %v303
    %v312 = vcombine.high %v270, %v270
    %v314 = vunpack.c.l.s4 1966171168
    %v315 = vunpack.c.0.s8 %v314
    %v316 = vlaneseq
    %v317 = vshrl.u32 %v316, 7
    %v318 = vsub.s32 %v315, %v317
    %v319 = vrot.slane %v270, %v318
    %v321 = vunpack.c.l.s4 1966171168
    %v322 = vunpack.c.0.s8 %v321
    %v323 = vlaneseq
    %v324 = vshrl.u32 %v323, 7
    %v325 = vsub.s32 %v322, %v324
    %v326 = vrot.slane %v312, %v325
    %v327 = vcombine.high %v319, %v319
    %v328 = vcombine.high %v326, %v326
    %v330 = vunpack.c.l.s4 1966171168
    %v331 = vunpack.c.0.s8 %v330
    %v332 = vlaneseq
    %v333 = vshrl.u32 %v332, 7
    %v334 = vsub.s32 %v331, %v333
    %v335 = vrot.slane %v319, %v334
    %v337 = vunpack.c.l.s4 1966171168
    %v338 = vunpack.c.0.s8 %v337
    %v339 = vlaneseq
    %v340 = vshrl.u32 %v339, 7
    %v341 = vsub.s32 %v338, %v340
    %v342 = vrot.slane %v326, %v341
    %v344 = vunpack.c.l.s4 1966171168
    %v345 = vunpack.c.0.s8 %v344
    %v346 = vlaneseq
    %v347 = vshrl.u32 %v346, 7
    %v348 = vsub.s32 %v345, %v347
    %v349 = vrot.slane %v327, %v348
    %v351 = vunpack.c.l.s4 1966171168
    %v352 = vunpack.c.0.s8 %v351
    %v353 = vlaneseq
    %v354 = vshrl.u32 %v353, 7
    %v355 = vsub.s32 %v352, %v354
    %v356 = vrot.slane %v328, %v355
    %v357 = vcombine.high %v335, %v335
    %v358 = vcombine.high %v342, %v342
    %v359 = vcombine.high %v349, %v349
    %v360 = vcombine.high %v356, %v356
    %v361 = vcombine.high %v271, %v271
    %v363 = vunpack.c.l.s4 1966171168
    %v364 = vunpack.c.0.s8 %v363
    %v365 = vlaneseq
    %v366 = vshrl.u32 %v365, 7
    %v367 = vsub.s32 %v364, %v366
    %v368 = vrot.slane %v271, %v367
    %v370 = vunpack.c.l.s4 1966171168
    %v371 = vunpack.c.0.s8 %v370
    %v372 = vlaneseq
    %v373 = vshrl.u32 %v372, 7
    %v374 = vsub.s32 %v371, %v373
    %v375 = vrot.slane %v361, %v374
    %v376 = vcombine.high %v368, %v368
    %v377 = vcombine.high %v375, %v375
    %v379 = vunpack.c.l.s4 1966171168
    %v380 = vunpack.c.0.s8 %v379
    %v381 = vlaneseq
    %v382 = vshrl.u32 %v381, 7
    %v383 = vsub.s32 %v380, %v382
    %v384 = vrot.slane %v368, %v383
    %v386 = vunpack.c.l.s4 1966171168
    %v387 = vunpack.c.0.s8 %v386
    %v388 = vlaneseq
    %v389 = vshrl.u32 %v388, 7
    %v390 = vsub.s32 %v387, %v389
    %v391 = vrot.slane %v375, %v390
    %v393 = vunpack.c.l.s4 1966171168
    %v394 = vunpack.c.0.s8 %v393
    %v395 = vlaneseq
    %v396 = vshrl.u32 %v395, 7
    %v397 = vsub.s32 %v394, %v396
    %v398 = vrot.slane %v376, %v397
    %v400 = vunpack.c.l.s4 1966171168
    %v401 = vunpack.c.0.s8 %v400
    %v402 = vlaneseq
    %v403 = vshrl.u32 %v402, 7
    %v404 = vsub.s32 %v401, %v403
    %v405 = vrot.slane %v377, %v404
    %v406 = vcombine.high %v384, %v384
    %v407 = vcombine.high %v391, %v391
    %v408 = vcombine.high %v398, %v398
    %v409 = vcombine.high %v405, %v405
    %v410 = vcombine.high %v272, %v272
    %v412 = vunpack.c.l.s4 1966171168
    %v413 = vunpack.c.0.s8 %v412
    %v414 = vlaneseq
    %v415 = vshrl.u32 %v414, 7
    %v416 = vsub.s32 %v413, %v415
    %v417 = vrot.slane %v272, %v416
    %v419 = vunpack.c.l.s4 1966171168
    %v420 = vunpack.c.0.s8 %v419
    %v421 = vlaneseq
    %v422 = vshrl.u32 %v421, 7
    %v423 = vsub.s32 %v420, %v422
    %v424 = vrot.slane %v410, %v423
    %v425 = vcombine.high %v417, %v417
    %v426 = vcombine.high %v424, %v424
    %v428 = vunpack.c.l.s4 1966171168
    %v429 = vunpack.c.0.s8 %v428
    %v430 = vlaneseq
    %v431 = vshrl.u32 %v430, 7
    %v432 = vsub.s32 %v429, %v431
    %v433 = vrot.slane %v417, %v432
    %v435 = vunpack.c.l.s4 1966171168
    %v436 = vunpack.c.0.s8 %v435
    %v437 = vlaneseq
    %v438 = vshrl.u32 %v437, 7
    %v439 = vsub.s32 %v436, %v438
    %v440 = vrot.slane %v424, %v439
    %v442 = vunpack.c.l.s4 1966171168
    %v443 = vunpack.c.0.s8 %v442
    %v444 = vlaneseq
    %v445 = vshrl.u32 %v444, 7
    %v446 = vsub.s32 %v443, %v445
    %v447 = vrot.slane %v425, %v446
    %v449 = vunpack.c.l.s4 1966171168
    %v450 = vunpack.c.0.s8 %v449
    %v451 = vlaneseq
    %v452 = vshrl.u32 %v451, 7
    %v453 = vsub.s32 %v450, %v452
    %v454 = vrot.slane %v426, %v453
    %v455 = vcombine.high %v433, %v433
    %v456 = vcombine.high %v440, %v440
    %v457 = vcombine.high %v447, %v447
    %v458 = vcombine.high %v454, %v454
    %v459 = vcombine.high %v273, %v273
    %v461 = vunpack.c.l.s4 1966171168
    %v462 = vunpack.c.0.s8 %v461
    %v463 = vlaneseq
    %v464 = vshrl.u32 %v463, 7
    %v465 = vsub.s32 %v462, %v464
    %v466 = vrot.slane %v273, %v465
    %v468 = vunpack.c.l.s4 1966171168
    %v469 = vunpack.c.0.s8 %v468
    %v470 = vlaneseq
    %v471 = vshrl.u32 %v470, 7
    %v472 = vsub.s32 %v469, %v471
    %v473 = vrot.slane %v459, %v472
    %v474 = vcombine.high %v466, %v466
    %v475 = vcombine.high %v473, %v473
    %v477 = vunpack.c.l.s4 1966171168
    %v478 = vunpack.c.0.s8 %v477
    %v479 = vlaneseq
    %v480 = vshrl.u32 %v479, 7
    %v481 = vsub.s32 %v478, %v480
    %v482 = vrot.slane %v466, %v481
    %v484 = vunpack.c.l.s4 1966171168
    %v485 = vunpack.c.0.s8 %v484
    %v486 = vlaneseq
    %v487 = vshrl.u32 %v486, 7
    %v488 = vsub.s32 %v485, %v487
    %v489 = vrot.slane %v473, %v488
    %v491 = vunpack.c.l.s4 1966171168
    %v492 = vunpack.c.0.s8 %v491
    %v493 = vlaneseq
    %v494 = vshrl.u32 %v493, 7
    %v495 = vsub.s32 %v492, %v494
    %v496 = vrot.slane %v474, %v495
    %v498 = vunpack.c.l.s4 1966171168
    %v499 = vunpack.c.0.s8 %v498
    %v500 = vlaneseq
    %v501 = vshrl.u32 %v500, 7
    %v502 = vsub.s32 %v499, %v501
    %v503 = vrot.slane %v475, %v502
    %v504 = vcombine.high %v482, %v482
    %v505 = vcombine.high %v489, %v489
    %v506 = vcombine.high %v496, %v496
    %v507 = vcombine.high %v503, %v503
    %v508 = vlaneseq
    %v509 = vshrl.u32 %v508, 7
    %v510 = vsub.s32 0, %v509
    %v511 = vrot.slane %v335, %v510
    %v512 = vlaneseq
    %v513 = vshrl.u32 %v512, 7
    %v514 = vsub.s32 0, %v513
    %v515 = vrot.slane %v349, %v514
    %v516 = vlaneseq
    %v517 = vshrl.u32 %v516, 7
    %v518 = vsub.s32 0, %v517
    %v519 = vrot.slane %v357, %v518
    %v520 = vlaneseq
    %v521 = vshrl.u32 %v520, 7
    %v522 = vsub.s32 0, %v521
    %v523 = vrot.slane %v359, %v522
    %v524 = vlaneseq
    %v525 = vshrl.u32 %v524, 7
    %v526 = vsub.s32 0, %v525
    %v527 = vrot.slane %v342, %v526
    %v528 = vlaneseq
    %v529 = vshrl.u32 %v528, 7
    %v530 = vsub.s32 0, %v529
    %v531 = vrot.slane %v356, %v530
    %v532 = vlaneseq
    %v533 = vshrl.u32 %v532, 7
    %v534 = vsub.s32 0, %v533
    %v535 = vrot.slane %v358, %v534
    %v536 = vlaneseq
    %v537 = vshrl.u32 %v536, 7
    %v538 = vsub.s32 0, %v537
    %v539 = vrot.slane %v360, %v538
    %v540 = vlaneseq
    %v541 = vshrl.u32 %v540, 7
    %v542 = vsub.s32 0, %v541
    %v543 = vrot.slane %v384, %v542
    %v544 = vlaneseq
    %v545 = vshrl.u32 %v544, 7
    %v546 = vsub.s32 0, %v545
    %v547 = vrot.slane %v398, %v546
    %v548 = vlaneseq
    %v549 = vshrl.u32 %v548, 7
    %v550 = vsub.s32 0, %v549
    %v551 = vrot.slane %v406, %v550
    %v552 = vlaneseq
    %v553 = vshrl.u32 %v552, 7
    %v554 = vsub.s32 0, %v553
    %v555 = vrot.slane %v408, %v554
    %v556 = vlaneseq
    %v557 = vshrl.u32 %v556, 7
    %v558 = vsub.s32 0, %v557
    %v559 = vrot.slane %v391, %v558
    %v560 = vlaneseq
    %v561 = vshrl.u32 %v560, 7
    %v562 = vsub.s32 0, %v561
    %v563 = vrot.slane %v405, %v562
    %v564 = vlaneseq
    %v565 = vshrl.u32 %v564, 7
    %v566 = vsub.s32 0, %v565
    %v567 = vrot.slane %v407, %v566
    %v568 = vlaneseq
    %v569 = vshrl.u32 %v568, 7
    %v570 = vsub.s32 0, %v569
    %v571 = vrot.slane %v409, %v570
    %v572 = vlaneseq
    %v573 = vshrl.u32 %v572, 7
    %v574 = vsub.s32 0, %v573
    %v575 = vrot.slane %v433, %v574
    %v576 = vlaneseq
    %v577 = vshrl.u32 %v576, 7
    %v578 = vsub.s32 0, %v577
    %v579 = vrot.slane %v447, %v578
    %v580 = vlaneseq
    %v581 = vshrl.u32 %v580, 7
    %v582 = vsub.s32 0, %v581
    %v583 = vrot.slane %v455, %v582
    %v584 = vlaneseq
    %v585 = vshrl.u32 %v584, 7
    %v586 = vsub.s32 0, %v585
    %v587 = vrot.slane %v457, %v586
    %v588 = vlaneseq
    %v589 = vshrl.u32 %v588, 7
    %v590 = vsub.s32 0, %v589
    %v591 = vrot.slane %v440, %v590
    %v592 = vlaneseq
    %v593 = vshrl.u32 %v592, 7
    %v594 = vsub.s32 0, %v593
    %v595 = vrot.slane %v454, %v594
    %v596 = vlaneseq
    %v597 = vshrl.u32 %v596, 7
    %v598 = vsub.s32 0, %v597
    %v599 = vrot.slane %v456, %v598
    %v600 = vlaneseq
    %v601 = vshrl.u32 %v600, 7
    %v602 = vsub.s32 0, %v601
    %v603 = vrot.slane %v458, %v602
    %v604 = vlaneseq
    %v605 = vshrl.u32 %v604, 7
    %v606 = vsub.s32 0, %v605
    %v607 = vrot.slane %v482, %v606
    %v608 = vlaneseq
    %v609 = vshrl.u32 %v608, 7
    %v610 = vsub.s32 0, %v609
    %v611 = vrot.slane %v496, %v610
    %v612 = vlaneseq
    %v613 = vshrl.u32 %v612, 7
    %v614 = vsub.s32 0, %v613
    %v615 = vrot.slane %v504, %v614
    %v616 = vlaneseq
    %v617 = vshrl.u32 %v616, 7
    %v618 = vsub.s32 0, %v617
    %v619 = vrot.slane %v506, %v618
    %v620 = vlaneseq
    %v621 = vshrl.u32 %v620, 7
    %v622 = vsub.s32 0, %v621
    %v623 = vrot.slane %v489, %v622
    %v624 = vlaneseq
    %v625 = vshrl.u32 %v624, 7
    %v626 = vsub.s32 0, %v625
    %v627 = vrot.slane %v503, %v626
    %v628 = vlaneseq
    %v629 = vshrl.u32 %v628, 7
    %v630 = vsub.s32 0, %v629
    %v631 = vrot.slane %v505, %v630
    %v632 = vlaneseq
    %v633 = vshrl.u32 %v632, 7
    %v634 = vsub.s32 0, %v633
    %v635 = vrot.slane %v507, %v634
    %v668 = vmul.f32 %v511, %v212
    %v669 = vmul.f32 %v511, %v217
    %v670 = vmul.f32 %v511, %v222
    %v671 = vmul.f32 %v511, %v227
    %v672 = vmul.f32 %v515, %v212
    %v673 = vmul.f32 %v515, %v217
    %v674 = vmul.f32 %v515, %v222
    %v675 = vmul.f32 %v515, %v227
    %v676 = vmul.f32 %v519, %v212
    %v677 = vmul.f32 %v519, %v217
    %v678 = vmul.f32 %v519, %v222
    %v679 = vmul.f32 %v519, %v227
    %v680 = vmul.f32 %v523, %v212
    %v681 = vmul.f32 %v523, %v217
    %v682 = vmul.f32 %v523, %v222
    %v683 = vmul.f32 %v523, %v227
    %v684 = vmul.f32 %v527, %v212
    %v685 = vmul.f32 %v527, %v217
    %v686 = vmul.f32 %v527, %v222
    %v687 = vmul.f32 %v527, %v227
    %v688 = vmul.f32 %v531, %v212
    %v689 = vmul.f32 %v531, %v217
    %v690 = vmul.f32 %v531, %v222
    %v691 = vmul.f32 %v531, %v227
    %v692 = vmul.f32 %v535, %v212
    %v693 = vmul.f32 %v535, %v217
    %v694 = vmul.f32 %v535, %v222
    %v695 = vmul.f32 %v535, %v227
    %v696 = vmul.f32 %v539, %v212
    %v697 = vmul.f32 %v539, %v217
    %v698 = vmul.f32 %v539, %v222
    %v699 = vmul.f32 %v539, %v227
    %v700 = vmul.f32 %v543, %v212
    %v701 = vmul.f32 %v543, %v217
    %v702 = vmul.f32 %v543, %v222
    %v703 = vmul.f32 %v543, %v227
    %v704 = vmul.f32 %v547, %v212
    %v705 = vmul.f32 %v547, %v217
    %v706 = vmul.f32 %v547, %v222
    %v707 = vmul.f32 %v547, %v227
    %v708 = vmul.f32 %v551, %v212
    %v709 = vmul.f32 %v551, %v217
    %v710 = vmul.f32 %v551, %v222
    %v711 = vmul.f32 %v551, %v227
    %v712 = vmul.f32 %v555, %v212
    %v713 = vmul.f32 %v555, %v217
    %v714 = vmul.f32 %v555, %v222
    %v715 = vmul.f32 %v555, %v227
    %v716 = vmul.f32 %v559, %v212
    %v717 = vmul.f32 %v559, %v217
    %v718 = vmul.f32 %v559, %v222
    %v719 = vmul.f32 %v559, %v227
    %v720 = vmul.f32 %v563, %v212
    %v721 = vmul.f32 %v563, %v217
    %v722 = vmul.f32 %v563, %v222
    %v723 = vmul.f32 %v563, %v227
    %v724 = vmul.f32 %v567, %v212
    %v725 = vmul.f32 %v567, %v217
    %v726 = vmul.f32 %v567, %v222
    %v727 = vmul.f32 %v567, %v227
    %v728 = vmul.f32 %v571, %v212
    %v729 = vmul.f32 %v571, %v217
    %v730 = vmul.f32 %v571, %v222
    %v731 = vmul.f32 %v571, %v227
    %v732 = vmul.f32 %v575, %v212
    %v733 = vmul.f32 %v575, %v217
    %v734 = vmul.f32 %v575, %v222
    %v735 = vmul.f32 %v575, %v227
    %v736 = vmul.f32 %v579, %v212
    %v737 = vmul.f32 %v579, %v217
    %v738 = vmul.f32 %v579, %v222
    %v739 = vmul.f32 %v579, %v227
    %v740 = vmul.f32 %v583, %v212
    %v741 = vmul.f32 %v583, %v217
    %v742 = vmul.f32 %v583, %v222
    %v743 = vmul.f32 %v583, %v227
    %v744 = vmul.f32 %v587, %v212
    %v745 = vmul.f32 %v587, %v217
    %v746 = vmul.f32 %v587, %v222
    %v747 = vmul.f32 %v587, %v227
    %v748 = vmul.f32 %v591, %v212
    %v749 = vmul.f32 %v591, %v217
    %v750 = vmul.f32 %v591, %v222
    %v751 = vmul.f32 %v591, %v227
    %v752 = vmul.f32 %v595, %v212
    %v753 = vmul.f32 %v595, %v217
    %v754 = vmul.f32 %v595, %v222
    %v755 = vmul.f32 %v595, %v227
    %v756 = vmul.f32 %v599, %v212
    %v757 = vmul.f32 %v599, %v217
    %v758 = vmul.f32 %v599, %v222
    %v759 = vmul.f32 %v599, %v227
    %v760 = vmul.f32 %v603, %v212
    %v761 = vmul.f32 %v603, %v217
    %v762 = vmul.f32 %v603, %v222
    %v763 = vmul.f32 %v603, %v227
    %v764 = vmul.f32 %v607, %v212
    %v765 = vmul.f32 %v607, %v217
    %v766 = vmul.f32 %v607, %v222
    %v767 = vmul.f32 %v607, %v227
    %v768 = vmul.f32 %v611, %v212
    %v769 = vmul.f32 %v611, %v217
    %v770 = vmul.f32 %v611, %v222
    %v771 = vmul.f32 %v611, %v227
    %v772 = vmul.f32 %v615, %v212
    %v773 = vmul.f32 %v615, %v217
    %v774 = vmul.f32 %v615, %v222
    %v775 = vmul.f32 %v615, %v227
    %v776 = vmul.f32 %v619, %v212
    %v777 = vmul.f32 %v619, %v217
    %v778 = vmul.f32 %v619, %v222
    %v779 = vmul.f32 %v619, %v227
    %v780 = vmul.f32 %v623, %v212
    %v781 = vmul.f32 %v623, %v217
    %v782 = vmul.f32 %v623, %v222
    %v783 = vmul.f32 %v623, %v227
    %v784 = vmul.f32 %v627, %v212
    %v785 = vmul.f32 %v627, %v217
    %v786 = vmul.f32 %v627, %v222
    %v787 = vmul.f32 %v627, %v227
    %v788 = vmul.f32 %v631, %v212
    %v789 = vmul.f32 %v631, %v217
    %v790 = vmul.f32 %v631, %v222
    %v791 = vmul.f32 %v631, %v227
    %v792 = vmul.f32 %v635, %v212
    %v793 = vmul.f32 %v635, %v217
    %v794 = vmul.f32 %v635, %v222
    %v795 = vmul.f32 %v635, %v227
    %v796 = vsub.f32 %v668, %v304
    %v797 = vsub.f32 %v669, %v305
    %v798 = vsub.f32 %v670, %v306
    %v799 = vsub.f32 %v671, %v307
    %v800 = vsub.f32 %v672, %v304
    %v801 = vsub.f32 %v673, %v305
    %v802 = vsub.f32 %v674, %v306
    %v803 = vsub.f32 %v675, %v307
    %v804 = vsub.f32 %v676, %v304
    %v805 = vsub.f32 %v677, %v305
    %v806 = vsub.f32 %v678, %v306
    %v807 = vsub.f32 %v679, %v307
    %v808 = vsub.f32 %v680, %v304
    %v809 = vsub.f32 %v681, %v305
    %v810 = vsub.f32 %v682, %v306
    %v811 = vsub.f32 %v683, %v307
    %v812 = vsub.f32 %v684, %v304
    %v813 = vsub.f32 %v685, %v305
    %v814 = vsub.f32 %v686, %v306
    %v815 = vsub.f32 %v687, %v307
    %v816 = vsub.f32 %v688, %v304
    %v817 = vsub.f32 %v689, %v305
    %v818 = vsub.f32 %v690, %v306
    %v819 = vsub.f32 %v691, %v307
    %v820 = vsub.f32 %v692, %v304
    %v821 = vsub.f32 %v693, %v305
    %v822 = vsub.f32 %v694, %v306
    %v823 = vsub.f32 %v695, %v307
    %v824 = vsub.f32 %v696, %v304
    %v825 = vsub.f32 %v697, %v305
    %v826 = vsub.f32 %v698, %v306
    %v827 = vsub.f32 %v699, %v307
    %v828 = vsub.f32 %v700, %v304
    %v829 = vsub.f32 %v701, %v305
    %v830 = vsub.f32 %v702, %v306
    %v831 = vsub.f32 %v703, %v307
    %v832 = vsub.f32 %v704, %v304
    %v833 = vsub.f32 %v705, %v305
    %v834 = vsub.f32 %v706, %v306
    %v835 = vsub.f32 %v707, %v307
    %v836 = vsub.f32 %v708, %v304
    %v837 = vsub.f32 %v709, %v305
    %v838 = vsub.f32 %v710, %v306
    %v839 = vsub.f32 %v711, %v307
    %v840 = vsub.f32 %v712, %v304
    %v841 = vsub.f32 %v713, %v305
    %v842 = vsub.f32 %v714, %v306
    %v843 = vsub.f32 %v715, %v307
    %v844 = vsub.f32 %v716, %v304
    %v845 = vsub.f32 %v717, %v305
    %v846 = vsub.f32 %v718, %v306
    %v847 = vsub.f32 %v719, %v307
    %v848 = vsub.f32 %v720, %v304
    %v849 = vsub.f32 %v721, %v305
    %v850 = vsub.f32 %v722, %v306
    %v851 = vsub.f32 %v723, %v307
    %v852 = vsub.f32 %v724, %v304
    %v853 = vsub.f32 %v725, %v305
    %v854 = vsub.f32 %v726, %v306
    %v855 = vsub.f32 %v727, %v307
    %v856 = vsub.f32 %v728, %v304
    %v857 = vsub.f32 %v729, %v305
    %v858 = vsub.f32 %v730, %v306
    %v859 = vsub.f32 %v731, %v307
    %v860 = vsub.f32 %v732, %v304
    %v861 = vsub.f32 %v733, %v305
    %v862 = vsub.f32 %v734, %v306
    %v863 = vsub.f32 %v735, %v307
    %v864 = vsub.f32 %v736, %v304
    %v865 = vsub.f32 %v737, %v305
    %v866 = vsub.f32 %v738, %v306
    %v867 = vsub.f32 %v739, %v307
    %v868 = vsub.f32 %v740, %v304
    %v869 = vsub.f32 %v741, %v305
    %v870 = vsub.f32 %v742, %v306
    %v871 = vsub.f32 %v743, %v307
    %v872 = vsub.f32 %v744, %v304
    %v873 = vsub.f32 %v745, %v305
    %v874 = vsub.f32 %v746, %v306
    %v875 = vsub.f32 %v747, %v307
    %v876 = vsub.f32 %v748, %v304
    %v877 = vsub.f32 %v749, %v305
    %v878 = vsub.f32 %v750, %v306
    %v879 = vsub.f32 %v751, %v307
    %v880 = vsub.f32 %v752, %v304
    %v881 = vsub.f32 %v753, %v305
    %v882 = vsub.f32 %v754, %v306
    %v883 = vsub.f32 %v755, %v307
    %v884 = vsub.f32 %v756, %v304
    %v885 = vsub.f32 %v757, %v305
    %v886 = vsub.f32 %v758, %v306
    %v887 = vsub.f32 %v759, %v307
    %v888 = vsub.f32 %v760, %v304
    %v889 = vsub.f32 %v761, %v305
    %v890 = vsub.f32 %v762, %v306
    %v891 = vsub.f32 %v763, %v307
    %v892 = vsub.f32 %v764, %v304
    %v893 = vsub.f32 %v765, %v305
    %v894 = vsub.f32 %v766, %v306
    %v895 = vsub.f32 %v767, %v307
    %v896 = vsub.f32 %v768, %v304
    %v897 = vsub.f32 %v769, %v305
    %v898 = vsub.f32 %v770, %v306
    %v899 = vsub.f32 %v771, %v307
    %v900 = vsub.f32 %v772, %v304
    %v901 = vsub.f32 %v773, %v305
    %v902 = vsub.f32 %v774, %v306
    %v903 = vsub.f32 %v775, %v307
    %v904 = vsub.f32 %v776, %v304
    %v905 = vsub.f32 %v777, %v305
    %v906 = vsub.f32 %v778, %v306
    %v907 = vsub.f32 %v779, %v307
    %v908 = vsub.f32 %v780, %v304
    %v909 = vsub.f32 %v781, %v305
    %v910 = vsub.f32 %v782, %v306
    %v911 = vsub.f32 %v783, %v307
    %v912 = vsub.f32 %v784, %v304
    %v913 = vsub.f32 %v785, %v305
    %v914 = vsub.f32 %v786, %v306
    %v915 = vsub.f32 %v787, %v307
    %v916 = vsub.f32 %v788, %v304
    %v917 = vsub.f32 %v789, %v305
    %v918 = vsub.f32 %v790, %v306
    %v919 = vsub.f32 %v791, %v307
    %v920 = vsub.f32 %v792, %v304
    %v921 = vsub.f32 %v793, %v305
    %v922 = vsub.f32 %v794, %v306
    %v923 = vsub.f32 %v795, %v307
    %v924 = vmul.f32 %v796, 1.442695
    %v925 = vpow.pop %v924
    %v926 = vmul.f32 %v797, 1.442695
    %v927 = vpow.pop %v926
    %v928 = vmul.f32 %v798, 1.442695
    %v929 = vpow.pop %v928
    %v930 = vmul.f32 %v799, 1.442695
    %v931 = vpow.pop %v930
    %v932 = vmul.f32 %v800, 1.442695
    %v933 = vpow.pop %v932
    %v934 = vmul.f32 %v801, 1.442695
    %v935 = vpow.pop %v934
    %v936 = vmul.f32 %v802, 1.442695
    %v937 = vpow.pop %v936
    %v938 = vmul.f32 %v803, 1.442695
    %v939 = vpow.pop %v938
    %v940 = vmul.f32 %v804, 1.442695
    %v941 = vpow.pop %v940
    %v942 = vmul.f32 %v805, 1.442695
    %v943 = vpow.pop %v942
    %v944 = vmul.f32 %v806, 1.442695
    %v945 = vpow.pop %v944
    %v946 = vmul.f32 %v807, 1.442695
    %v947 = vpow.pop %v946
    %v948 = vmul.f32 %v808, 1.442695
    %v949 = vpow.pop %v948
    %v950 = vmul.f32 %v809, 1.442695
    %v951 = vpow.pop %v950
    %v952 = vmul.f32 %v810, 1.442695
    %v953 = vpow.pop %v952
    %v954 = vmul.f32 %v811, 1.442695
    %v955 = vpow.pop %v954
    %v956 = vmul.f32 %v812, 1.442695
    %v957 = vpow.pop %v956
    %v958 = vmul.f32 %v813, 1.442695
    %v959 = vpow.pop %v958
    %v960 = vmul.f32 %v814, 1.442695
    %v961 = vpow.pop %v960
    %v962 = vmul.f32 %v815, 1.442695
    %v963 = vpow.pop %v962
    %v964 = vmul.f32 %v816, 1.442695
    %v965 = vpow.pop %v964
    %v966 = vmul.f32 %v817, 1.442695
    %v967 = vpow.pop %v966
    %v968 = vmul.f32 %v818, 1.442695
    %v969 = vpow.pop %v968
    %v970 = vmul.f32 %v819, 1.442695
    %v971 = vpow.pop %v970
    %v972 = vmul.f32 %v820, 1.442695
    %v973 = vpow.pop %v972
    %v974 = vmul.f32 %v821, 1.442695
    %v975 = vpow.pop %v974
    %v976 = vmul.f32 %v822, 1.442695
    %v977 = vpow.pop %v976
    %v978 = vmul.f32 %v823, 1.442695
    %v979 = vpow.pop %v978
    %v980 = vmul.f32 %v824, 1.442695
    %v981 = vpow.pop %v980
    %v982 = vmul.f32 %v825, 1.442695
    %v983 = vpow.pop %v982
    %v984 = vmul.f32 %v826, 1.442695
    %v985 = vpow.pop %v984
    %v986 = vmul.f32 %v827, 1.442695
    %v987 = vpow.pop %v986
    %v988 = vmul.f32 %v828, 1.442695
    %v989 = vpow.pop %v988
    %v990 = vmul.f32 %v829, 1.442695
    %v991 = vpow.pop %v990
    %v992 = vmul.f32 %v830, 1.442695
    %v993 = vpow.pop %v992
    %v994 = vmul.f32 %v831, 1.442695
    %v995 = vpow.pop %v994
    %v996 = vmul.f32 %v832, 1.442695
    %v997 = vpow.pop %v996
    %v998 = vmul.f32 %v833, 1.442695
    %v999 = vpow.pop %v998
    %v1000 = vmul.f32 %v834, 1.442695
    %v1001 = vpow.pop %v1000
    %v1002 = vmul.f32 %v835, 1.442695
    %v1003 = vpow.pop %v1002
    %v1004 = vmul.f32 %v836, 1.442695
    %v1005 = vpow.pop %v1004
    %v1006 = vmul.f32 %v837, 1.442695
    %v1007 = vpow.pop %v1006
    %v1008 = vmul.f32 %v838, 1.442695
    %v1009 = vpow.pop %v1008
    %v1010 = vmul.f32 %v839, 1.442695
    %v1011 = vpow.pop %v1010
    %v1012 = vmul.f32 %v840, 1.442695
    %v1013 = vpow.pop %v1012
    %v1014 = vmul.f32 %v841, 1.442695
    %v1015 = vpow.pop %v1014
    %v1016 = vmul.f32 %v842, 1.442695
    %v1017 = vpow.pop %v1016
    %v1018 = vmul.f32 %v843, 1.442695
    %v1019 = vpow.pop %v1018
    %v1020 = vmul.f32 %v844, 1.442695
    %v1021 = vpow.pop %v1020
    %v1022 = vmul.f32 %v845, 1.442695
    %v1023 = vpow.pop %v1022
    %v1024 = vmul.f32 %v846, 1.442695
    %v1025 = vpow.pop %v1024
    %v1026 = vmul.f32 %v847, 1.442695
    %v1027 = vpow.pop %v1026
    %v1028 = vmul.f32 %v848, 1.442695
    %v1029 = vpow.pop %v1028
    %v1030 = vmul.f32 %v849, 1.442695
    %v1031 = vpow.pop %v1030
    %v1032 = vmul.f32 %v850, 1.442695
    %v1033 = vpow.pop %v1032
    %v1034 = vmul.f32 %v851, 1.442695
    %v1035 = vpow.pop %v1034
    %v1036 = vmul.f32 %v852, 1.442695
    %v1037 = vpow.pop %v1036
    %v1038 = vmul.f32 %v853, 1.442695
    %v1039 = vpow.pop %v1038
    %v1040 = vmul.f32 %v854, 1.442695
    %v1041 = vpow.pop %v1040
    %v1042 = vmul.f32 %v855, 1.442695
    %v1043 = vpow.pop %v1042
    %v1044 = vmul.f32 %v856, 1.442695
    %v1045 = vpow.pop %v1044
    %v1046 = vmul.f32 %v857, 1.442695
    %v1047 = vpow.pop %v1046
    %v1048 = vmul.f32 %v858, 1.442695
    %v1049 = vpow.pop %v1048
    %v1050 = vmul.f32 %v859, 1.442695
    %v1051 = vpow.pop %v1050
    %v1052 = vmul.f32 %v860, 1.442695
    %v1053 = vpow.pop %v1052
    %v1054 = vmul.f32 %v861, 1.442695
    %v1055 = vpow.pop %v1054
    %v1056 = vmul.f32 %v862, 1.442695
    %v1057 = vpow.pop %v1056
    %v1058 = vmul.f32 %v863, 1.442695
    %v1059 = vpow.pop %v1058
    %v1060 = vmul.f32 %v864, 1.442695
    %v1061 = vpow.pop %v1060
    %v1062 = vmul.f32 %v865, 1.442695
    %v1063 = vpow.pop %v1062
    %v1064 = vmul.f32 %v866, 1.442695
    %v1065 = vpow.pop %v1064
    %v1066 = vmul.f32 %v867, 1.442695
    %v1067 = vpow.pop %v1066
    %v1068 = vmul.f32 %v868, 1.442695
    %v1069 = vpow.pop %v1068
    %v1070 = vmul.f32 %v869, 1.442695
    %v1071 = vpow.pop %v1070
    %v1072 = vmul.f32 %v870, 1.442695
    %v1073 = vpow.pop %v1072
    %v1074 = vmul.f32 %v871, 1.442695
    %v1075 = vpow.pop %v1074
    %v1076 = vmul.f32 %v872, 1.442695
    %v1077 = vpow.pop %v1076
    %v1078 = vmul.f32 %v873, 1.442695
    %v1079 = vpow.pop %v1078
    %v1080 = vmul.f32 %v874, 1.442695
    %v1081 = vpow.pop %v1080
    %v1082 = vmul.f32 %v875, 1.442695
    %v1083 = vpow.pop %v1082
    %v1084 = vmul.f32 %v876, 1.442695
    %v1085 = vpow.pop %v1084
    %v1086 = vmul.f32 %v877, 1.442695
    %v1087 = vpow.pop %v1086
    %v1088 = vmul.f32 %v878, 1.442695
    %v1089 = vpow.pop %v1088
    %v1090 = vmul.f32 %v879, 1.442695
    %v1091 = vpow.pop %v1090
    %v1092 = vmul.f32 %v880, 1.442695
    %v1093 = vpow.pop %v1092
    %v1094 = vmul.f32 %v881, 1.442695
    %v1095 = vpow.pop %v1094
    %v1096 = vmul.f32 %v882, 1.442695
    %v1097 = vpow.pop %v1096
    %v1098 = vmul.f32 %v883, 1.442695
    %v1099 = vpow.pop %v1098
    %v1100 = vmul.f32 %v884, 1.442695
    %v1101 = vpow.pop %v1100
    %v1102 = vmul.f32 %v885, 1.442695
    %v1103 = vpow.pop %v1102
    %v1104 = vmul.f32 %v886, 1.442695
    %v1105 = vpow.pop %v1104
    %v1106 = vmul.f32 %v887, 1.442695
    %v1107 = vpow.pop %v1106
    %v1108 = vmul.f32 %v888, 1.442695
    %v1109 = vpow.pop %v1108
    %v1110 = vmul.f32 %v889, 1.442695
    %v1111 = vpow.pop %v1110
    %v1112 = vmul.f32 %v890, 1.442695
    %v1113 = vpow.pop %v1112
    %v1114 = vmul.f32 %v891, 1.442695
    %v1115 = vpow.pop %v1114
    %v1116 = vmul.f32 %v892, 1.442695
    %v1117 = vpow.pop %v1116
    %v1118 = vmul.f32 %v893, 1.442695
    %v1119 = vpow.pop %v1118
    %v1120 = vmul.f32 %v894, 1.442695
    %v1121 = vpow.pop %v1120
    %v1122 = vmul.f32 %v895, 1.442695
    %v1123 = vpow.pop %v1122
    %v1124 = vmul.f32 %v896, 1.442695
    %v1125 = vpow.pop %v1124
    %v1126 = vmul.f32 %v897, 1.442695
    %v1127 = vpow.pop %v1126
    %v1128 = vmul.f32 %v898, 1.442695
    %v1129 = vpow.pop %v1128
    %v1130 = vmul.f32 %v899, 1.442695
    %v1131 = vpow.pop %v1130
    %v1132 = vmul.f32 %v900, 1.442695
    %v1133 = vpow.pop %v1132
    %v1134 = vmul.f32 %v901, 1.442695
    %v1135 = vpow.pop %v1134
    %v1136 = vmul.f32 %v902, 1.442695
    %v1137 = vpow.pop %v1136
    %v1138 = vmul.f32 %v903, 1.442695
    %v1139 = vpow.pop %v1138
    %v1140 = vmul.f32 %v904, 1.442695
    %v1141 = vpow.pop %v1140
    %v1142 = vmul.f32 %v905, 1.442695
    %v1143 = vpow.pop %v1142
    %v1144 = vmul.f32 %v906, 1.442695
    %v1145 = vpow.pop %v1144
    %v1146 = vmul.f32 %v907, 1.442695
    %v1147 = vpow.pop %v1146
    %v1148 = vmul.f32 %v908, 1.442695
    %v1149 = vpow.pop %v1148
    %v1150 = vmul.f32 %v909, 1.442695
    %v1151 = vpow.pop %v1150
    %v1152 = vmul.f32 %v910, 1.442695
    %v1153 = vpow.pop %v1152
    %v1154 = vmul.f32 %v911, 1.442695
    %v1155 = vpow.pop %v1154
    %v1156 = vmul.f32 %v912, 1.442695
    %v1157 = vpow.pop %v1156
    %v1158 = vmul.f32 %v913, 1.442695
    %v1159 = vpow.pop %v1158
    %v1160 = vmul.f32 %v914, 1.442695
    %v1161 = vpow.pop %v1160
    %v1162 = vmul.f32 %v915, 1.442695
    %v1163 = vpow.pop %v1162
    %v1164 = vmul.f32 %v916, 1.442695
    %v1165 = vpow.pop %v1164
    %v1166 = vmul.f32 %v917, 1.442695
    %v1167 = vpow.pop %v1166
    %v1168 = vmul.f32 %v918, 1.442695
    %v1169 = vpow.pop %v1168
    %v1170 = vmul.f32 %v919, 1.442695
    %v1171 = vpow.pop %v1170
    %v1172 = vmul.f32 %v920, 1.442695
    %v1173 = vpow.pop %v1172
    %v1174 = vmul.f32 %v921, 1.442695
    %v1175 = vpow.pop %v1174
    %v1176 = vmul.f32 %v922, 1.442695
    %v1177 = vpow.pop %v1176
    %v1178 = vmul.f32 %v923, 1.442695
    %v1179 = vpow.pop %v1178
    %v1180 = vadd.f32 %v925, %v933
    %v1181 = vadd.f32 %v1180, %v941
    %v1182 = vadd.f32 %v1181, %v949
    %v1183 = vadd.f32 %v1182, %v957
    %v1184 = vadd.f32 %v1183, %v965
    %v1185 = vadd.f32 %v1184, %v973
    %v1186 = vadd.f32 %v1185, %v981
    %v1187 = vadd.f32 %v1186, %v989
    %v1188 = vadd.f32 %v1187, %v997
    %v1189 = vadd.f32 %v1188, %v1005
    %v1190 = vadd.f32 %v1189, %v1013
    %v1191 = vadd.f32 %v1190, %v1021
    %v1192 = vadd.f32 %v1191, %v1029
    %v1193 = vadd.f32 %v1192, %v1037
    %v1194 = vadd.f32 %v1193, %v1045
    %v1195 = vadd.f32 %v1194, %v1053
    %v1196 = vadd.f32 %v1195, %v1061
    %v1197 = vadd.f32 %v1196, %v1069
    %v1198 = vadd.f32 %v1197, %v1077
    %v1199 = vadd.f32 %v1198, %v1085
    %v1200 = vadd.f32 %v1199, %v1093
    %v1201 = vadd.f32 %v1200, %v1101
    %v1202 = vadd.f32 %v1201, %v1109
    %v1203 = vadd.f32 %v1202, %v1117
    %v1204 = vadd.f32 %v1203, %v1125
    %v1205 = vadd.f32 %v1204, %v1133
    %v1206 = vadd.f32 %v1205, %v1141
    %v1207 = vadd.f32 %v1206, %v1149
    %v1208 = vadd.f32 %v1207, %v1157
    %v1209 = vadd.f32 %v1208, %v1165
    %v1210 = vadd.f32 %v1209, %v1173
    %v1211 = vadd.f32 %v927, %v935
    %v1212 = vadd.f32 %v1211, %v943
    %v1213 = vadd.f32 %v1212, %v951
    %v1214 = vadd.f32 %v1213, %v959
    %v1215 = vadd.f32 %v1214, %v967
    %v1216 = vadd.f32 %v1215, %v975
    %v1217 = vadd.f32 %v1216, %v983
    %v1218 = vadd.f32 %v1217, %v991
    %v1219 = vadd.f32 %v1218, %v999
    %v1220 = vadd.f32 %v1219, %v1007
    %v1221 = vadd.f32 %v1220, %v1015
    %v1222 = vadd.f32 %v1221, %v1023
    %v1223 = vadd.f32 %v1222, %v1031
    %v1224 = vadd.f32 %v1223, %v1039
    %v1225 = vadd.f32 %v1224, %v1047
    %v1226 = vadd.f32 %v1225, %v1055
    %v1227 = vadd.f32 %v1226, %v1063
    %v1228 = vadd.f32 %v1227, %v1071
    %v1229 = vadd.f32 %v1228, %v1079
    %v1230 = vadd.f32 %v1229, %v1087
    %v1231 = vadd.f32 %v1230, %v1095
    %v1232 = vadd.f32 %v1231, %v1103
    %v1233 = vadd.f32 %v1232, %v1111
    %v1234 = vadd.f32 %v1233, %v1119
    %v1235 = vadd.f32 %v1234, %v1127
    %v1236 = vadd.f32 %v1235, %v1135
    %v1237 = vadd.f32 %v1236, %v1143
    %v1238 = vadd.f32 %v1237, %v1151
    %v1239 = vadd.f32 %v1238, %v1159
    %v1240 = vadd.f32 %v1239, %v1167
    %v1241 = vadd.f32 %v1240, %v1175
    %v1242 = vadd.f32 %v929, %v937
    %v1243 = vadd.f32 %v1242, %v945
    %v1244 = vadd.f32 %v1243, %v953
    %v1245 = vadd.f32 %v1244, %v961
    %v1246 = vadd.f32 %v1245, %v969
    %v1247 = vadd.f32 %v1246, %v977
    %v1248 = vadd.f32 %v1247, %v985
    %v1249 = vadd.f32 %v1248, %v993
    %v1250 = vadd.f32 %v1249, %v1001
    %v1251 = vadd.f32 %v1250, %v1009
    %v1252 = vadd.f32 %v1251, %v1017
    %v1253 = vadd.f32 %v1252, %v1025
    %v1254 = vadd.f32 %v1253, %v1033
    %v1255 = vadd.f32 %v1254, %v1041
    %v1256 = vadd.f32 %v1255, %v1049
    %v1257 = vadd.f32 %v1256, %v1057
    %v1258 = vadd.f32 %v1257, %v1065
    %v1259 = vadd.f32 %v1258, %v1073
    %v1260 = vadd.f32 %v1259, %v1081
    %v1261 = vadd.f32 %v1260, %v1089
    %v1262 = vadd.f32 %v1261, %v1097
    %v1263 = vadd.f32 %v1262, %v1105
    %v1264 = vadd.f32 %v1263, %v1113
    %v1265 = vadd.f32 %v1264, %v1121
    %v1266 = vadd.f32 %v1265, %v1129
    %v1267 = vadd.f32 %v1266, %v1137
    %v1268 = vadd.f32 %v1267, %v1145
    %v1269 = vadd.f32 %v1268, %v1153
    %v1270 = vadd.f32 %v1269, %v1161
    %v1271 = vadd.f32 %v1270, %v1169
    %v1272 = vadd.f32 %v1271, %v1177
    %v1273 = vadd.f32 %v931, %v939
    %v1274 = vadd.f32 %v1273, %v947
    %v1275 = vadd.f32 %v1274, %v955
    %v1276 = vadd.f32 %v1275, %v963
    %v1277 = vadd.f32 %v1276, %v971
    %v1278 = vadd.f32 %v1277, %v979
    %v1279 = vadd.f32 %v1278, %v987
    %v1280 = vadd.f32 %v1279, %v995
    %v1281 = vadd.f32 %v1280, %v1003
    %v1282 = vadd.f32 %v1281, %v1011
    %v1283 = vadd.f32 %v1282, %v1019
    %v1284 = vadd.f32 %v1283, %v1027
    %v1285 = vadd.f32 %v1284, %v1035
    %v1286 = vadd.f32 %v1285, %v1043
    %v1287 = vadd.f32 %v1286, %v1051
    %v1288 = vadd.f32 %v1287, %v1059
    %v1289 = vadd.f32 %v1288, %v1067
    %v1290 = vadd.f32 %v1289, %v1075
    %v1291 = vadd.f32 %v1290, %v1083
    %v1292 = vadd.f32 %v1291, %v1091
    %v1293 = vadd.f32 %v1292, %v1099
    %v1294 = vadd.f32 %v1293, %v1107
    %v1295 = vadd.f32 %v1294, %v1115
    %v1296 = vadd.f32 %v1295, %v1123
    %v1297 = vadd.f32 %v1296, %v1131
    %v1298 = vadd.f32 %v1297, %v1139
    %v1299 = vadd.f32 %v1298, %v1147
    %v1300 = vadd.f32 %v1299, %v1155
    %v1301 = vadd.f32 %v1300, %v1163
    %v1302 = vadd.f32 %v1301, %v1171
    %v1303 = vadd.f32 %v1302, %v1179
    %v1308 = vcombine.high %v253, %v253
    %v1310 = vunpack.c.l.s4 1966171168
    %v1311 = vunpack.c.0.s8 %v1310
    %v1312 = vlaneseq
    %v1313 = vshrl.u32 %v1312, 7
    %v1314 = vsub.s32 %v1311, %v1313
    %v1315 = vrot.slane %v253, %v1314
    %v1317 = vunpack.c.l.s4 1966171168
    %v1318 = vunpack.c.0.s8 %v1317
    %v1319 = vlaneseq
    %v1320 = vshrl.u32 %v1319, 7
    %v1321 = vsub.s32 %v1318, %v1320
    %v1322 = vrot.slane %v1308, %v1321
    %v1323 = vcombine.high %v1315, %v1315
    %v1324 = vcombine.high %v1322, %v1322
    %v1326 = vunpack.c.l.s4 1966171168
    %v1327 = vunpack.c.0.s8 %v1326
    %v1328 = vlaneseq
    %v1329 = vshrl.u32 %v1328, 7
    %v1330 = vsub.s32 %v1327, %v1329
    %v1331 = vrot.slane %v1315, %v1330
    %v1333 = vunpack.c.l.s4 1966171168
    %v1334 = vunpack.c.0.s8 %v1333
    %v1335 = vlaneseq
    %v1336 = vshrl.u32 %v1335, 7
    %v1337 = vsub.s32 %v1334, %v1336
    %v1338 = vrot.slane %v1322, %v1337
    %v1340 = vunpack.c.l.s4 1966171168
    %v1341 = vunpack.c.0.s8 %v1340
    %v1342 = vlaneseq
    %v1343 = vshrl.u32 %v1342, 7
    %v1344 = vsub.s32 %v1341, %v1343
    %v1345 = vrot.slane %v1323, %v1344
    %v1347 = vunpack.c.l.s4 1966171168
    %v1348 = vunpack.c.0.s8 %v1347
    %v1349 = vlaneseq
    %v1350 = vshrl.u32 %v1349, 7
    %v1351 = vsub.s32 %v1348, %v1350
    %v1352 = vrot.slane %v1324, %v1351
    %v1353 = vcombine.high %v1331, %v1331
    %v1354 = vcombine.high %v1338, %v1338
    %v1355 = vcombine.high %v1345, %v1345
    %v1356 = vcombine.high %v1352, %v1352
    %v1357 = vcombine.high %v258, %v258
    %v1359 = vunpack.c.l.s4 1966171168
    %v1360 = vunpack.c.0.s8 %v1359
    %v1361 = vlaneseq
    %v1362 = vshrl.u32 %v1361, 7
    %v1363 = vsub.s32 %v1360, %v1362
    %v1364 = vrot.slane %v258, %v1363
    %v1366 = vunpack.c.l.s4 1966171168
    %v1367 = vunpack.c.0.s8 %v1366
    %v1368 = vlaneseq
    %v1369 = vshrl.u32 %v1368, 7
    %v1370 = vsub.s32 %v1367, %v1369
    %v1371 = vrot.slane %v1357, %v1370
    %v1372 = vcombine.high %v1364, %v1364
    %v1373 = vcombine.high %v1371, %v1371
    %v1375 = vunpack.c.l.s4 1966171168
    %v1376 = vunpack.c.0.s8 %v1375
    %v1377 = vlaneseq
    %v1378 = vshrl.u32 %v1377, 7
    %v1379 = vsub.s32 %v1376, %v1378
    %v1380 = vrot.slane %v1364, %v1379
    %v1382 = vunpack.c.l.s4 1966171168
    %v1383 = vunpack.c.0.s8 %v1382
    %v1384 = vlaneseq
    %v1385 = vshrl.u32 %v1384, 7
    %v1386 = vsub.s32 %v1383, %v1385
    %v1387 = vrot.slane %v1371, %v1386
    %v1389 = vunpack.c.l.s4 1966171168
    %v1390 = vunpack.c.0.s8 %v1389
    %v1391 = vlaneseq
    %v1392 = vshrl.u32 %v1391, 7
    %v1393 = vsub.s32 %v1390, %v1392
    %v1394 = vrot.slane %v1372, %v1393
    %v1396 = vunpack.c.l.s4 1966171168
    %v1397 = vunpack.c.0.s8 %v1396
    %v1398 = vlaneseq
    %v1399 = vshrl.u32 %v1398, 7
    %v1400 = vsub.s32 %v1397, %v1399
    %v1401 = vrot.slane %v1373, %v1400
    %v1402 = vcombine.high %v1380, %v1380
    %v1403 = vcombine.high %v1387, %v1387
    %v1404 = vcombine.high %v1394, %v1394
    %v1405 = vcombine.high %v1401, %v1401
    %v1406 = vcombine.high %v263, %v263
    %v1408 = vunpack.c.l.s4 1966171168
    %v1409 = vunpack.c.0.s8 %v1408
    %v1410 = vlaneseq
    %v1411 = vshrl.u32 %v1410, 7
    %v1412 = vsub.s32 %v1409, %v1411
    %v1413 = vrot.slane %v263, %v1412
    %v1415 = vunpack.c.l.s4 1966171168
    %v1416 = vunpack.c.0.s8 %v1415
    %v1417 = vlaneseq
    %v1418 = vshrl.u32 %v1417, 7
    %v1419 = vsub.s32 %v1416, %v1418
    %v1420 = vrot.slane %v1406, %v1419
    %v1421 = vcombine.high %v1413, %v1413
    %v1422 = vcombine.high %v1420, %v1420
    %v1424 = vunpack.c.l.s4 1966171168
    %v1425 = vunpack.c.0.s8 %v1424
    %v1426 = vlaneseq
    %v1427 = vshrl.u32 %v1426, 7
    %v1428 = vsub.s32 %v1425, %v1427
    %v1429 = vrot.slane %v1413, %v1428
    %v1431 = vunpack.c.l.s4 1966171168
    %v1432 = vunpack.c.0.s8 %v1431
    %v1433 = vlaneseq
    %v1434 = vshrl.u32 %v1433, 7
    %v1435 = vsub.s32 %v1432, %v1434
    %v1436 = vrot.slane %v1420, %v1435
    %v1438 = vunpack.c.l.s4 1966171168
    %v1439 = vunpack.c.0.s8 %v1438
    %v1440 = vlaneseq
    %v1441 = vshrl.u32 %v1440, 7
    %v1442 = vsub.s32 %v1439, %v1441
    %v1443 = vrot.slane %v1421, %v1442
    %v1445 = vunpack.c.l.s4 1966171168
    %v1446 = vunpack.c.0.s8 %v1445
    %v1447 = vlaneseq
    %v1448 = vshrl.u32 %v1447, 7
    %v1449 = vsub.s32 %v1446, %v1448
    %v1450 = vrot.slane %v1422, %v1449
    %v1451 = vcombine.high %v1429, %v1429
    %v1452 = vcombine.high %v1436, %v1436
    %v1453 = vcombine.high %v1443, %v1443
    %v1454 = vcombine.high %v1450, %v1450
    %v1455 = vcombine.high %v268, %v268
    %v1457 = vunpack.c.l.s4 1966171168
    %v1458 = vunpack.c.0.s8 %v1457
    %v1459 = vlaneseq
    %v1460 = vshrl.u32 %v1459, 7
    %v1461 = vsub.s32 %v1458, %v1460
    %v1462 = vrot.slane %v268, %v1461
    %v1464 = vunpack.c.l.s4 1966171168
    %v1465 = vunpack.c.0.s8 %v1464
    %v1466 = vlaneseq
    %v1467 = vshrl.u32 %v1466, 7
    %v1468 = vsub.s32 %v1465, %v1467
    %v1469 = vrot.slane %v1455, %v1468
    %v1470 = vcombine.high %v1462, %v1462
    %v1471 = vcombine.high %v1469, %v1469
    %v1473 = vunpack.c.l.s4 1966171168
    %v1474 = vunpack.c.0.s8 %v1473
    %v1475 = vlaneseq
    %v1476 = vshrl.u32 %v1475, 7
    %v1477 = vsub.s32 %v1474, %v1476
    %v1478 = vrot.slane %v1462, %v1477
    %v1480 = vunpack.c.l.s4 1966171168
    %v1481 = vunpack.c.0.s8 %v1480
    %v1482 = vlaneseq
    %v1483 = vshrl.u32 %v1482, 7
    %v1484 = vsub.s32 %v1481, %v1483
    %v1485 = vrot.slane %v1469, %v1484
    %v1487 = vunpack.c.l.s4 1966171168
    %v1488 = vunpack.c.0.s8 %v1487
    %v1489 = vlaneseq
    %v1490 = vshrl.u32 %v1489, 7
    %v1491 = vsub.s32 %v1488, %v1490
    %v1492 = vrot.slane %v1470, %v1491
    %v1494 = vunpack.c.l.s4 1966171168
    %v1495 = vunpack.c.0.s8 %v1494
    %v1496 = vlaneseq
    %v1497 = vshrl.u32 %v1496, 7
    %v1498 = vsub.s32 %v1495, %v1497
    %v1499 = vrot.slane %v1471, %v1498
    %v1500 = vcombine.high %v1478, %v1478
    %v1501 = vcombine.high %v1485, %v1485
    %v1502 = vcombine.high %v1492, %v1492
    %v1503 = vcombine.high %v1499, %v1499
    %v1504 = vlaneseq
    %v1505 = vshrl.u32 %v1504, 7
    %v1506 = vsub.s32 0, %v1505
    %v1507 = vrot.slane %v1331, %v1506
    %v1508 = vlaneseq
    %v1509 = vshrl.u32 %v1508, 7
    %v1510 = vsub.s32 0, %v1509
    %v1511 = vrot.slane %v1345, %v1510
    %v1512 = vlaneseq
    %v1513 = vshrl.u32 %v1512, 7
    %v1514 = vsub.s32 0, %v1513
    %v1515 = vrot.slane %v1353, %v1514
    %v1516 = vlaneseq
    %v1517 = vshrl.u32 %v1516, 7
    %v1518 = vsub.s32 0, %v1517
    %v1519 = vrot.slane %v1355, %v1518
    %v1520 = vlaneseq
    %v1521 = vshrl.u32 %v1520, 7
    %v1522 = vsub.s32 0, %v1521
    %v1523 = vrot.slane %v1338, %v1522
    %v1524 = vlaneseq
    %v1525 = vshrl.u32 %v1524, 7
    %v1526 = vsub.s32 0, %v1525
    %v1527 = vrot.slane %v1352, %v1526
    %v1528 = vlaneseq
    %v1529 = vshrl.u32 %v1528, 7
    %v1530 = vsub.s32 0, %v1529
    %v1531 = vrot.slane %v1354, %v1530
    %v1532 = vlaneseq
    %v1533 = vshrl.u32 %v1532, 7
    %v1534 = vsub.s32 0, %v1533
    %v1535 = vrot.slane %v1356, %v1534
    %v1536 = vlaneseq
    %v1537 = vshrl.u32 %v1536, 7
    %v1538 = vsub.s32 0, %v1537
    %v1539 = vrot.slane %v1380, %v1538
    %v1540 = vlaneseq
    %v1541 = vshrl.u32 %v1540, 7
    %v1542 = vsub.s32 0, %v1541
    %v1543 = vrot.slane %v1394, %v1542
    %v1544 = vlaneseq
    %v1545 = vshrl.u32 %v1544, 7
    %v1546 = vsub.s32 0, %v1545
    %v1547 = vrot.slane %v1402, %v1546
    %v1548 = vlaneseq
    %v1549 = vshrl.u32 %v1548, 7
    %v1550 = vsub.s32 0, %v1549
    %v1551 = vrot.slane %v1404, %v1550
    %v1552 = vlaneseq
    %v1553 = vshrl.u32 %v1552, 7
    %v1554 = vsub.s32 0, %v1553
    %v1555 = vrot.slane %v1387, %v1554
    %v1556 = vlaneseq
    %v1557 = vshrl.u32 %v1556, 7
    %v1558 = vsub.s32 0, %v1557
    %v1559 = vrot.slane %v1401, %v1558
    %v1560 = vlaneseq
    %v1561 = vshrl.u32 %v1560, 7
    %v1562 = vsub.s32 0, %v1561
    %v1563 = vrot.slane %v1403, %v1562
    %v1564 = vlaneseq
    %v1565 = vshrl.u32 %v1564, 7
    %v1566 = vsub.s32 0, %v1565
    %v1567 = vrot.slane %v1405, %v1566
    %v1568 = vlaneseq
    %v1569 = vshrl.u32 %v1568, 7
    %v1570 = vsub.s32 0, %v1569
    %v1571 = vrot.slane %v1429, %v1570
    %v1572 = vlaneseq
    %v1573 = vshrl.u32 %v1572, 7
    %v1574 = vsub.s32 0, %v1573
    %v1575 = vrot.slane %v1443, %v1574
    %v1576 = vlaneseq
    %v1577 = vshrl.u32 %v1576, 7
    %v1578 = vsub.s32 0, %v1577
    %v1579 = vrot.slane %v1451, %v1578
    %v1580 = vlaneseq
    %v1581 = vshrl.u32 %v1580, 7
    %v1582 = vsub.s32 0, %v1581
    %v1583 = vrot.slane %v1453, %v1582
    %v1584 = vlaneseq
    %v1585 = vshrl.u32 %v1584, 7
    %v1586 = vsub.s32 0, %v1585
    %v1587 = vrot.slane %v1436, %v1586
    %v1588 = vlaneseq
    %v1589 = vshrl.u32 %v1588, 7
    %v1590 = vsub.s32 0, %v1589
    %v1591 = vrot.slane %v1450, %v1590
    %v1592 = vlaneseq
    %v1593 = vshrl.u32 %v1592, 7
    %v1594 = vsub.s32 0, %v1593
    %v1595 = vrot.slane %v1452, %v1594
    %v1596 = vlaneseq
    %v1597 = vshrl.u32 %v1596, 7
    %v1598 = vsub.s32 0, %v1597
    %v1599 = vrot.slane %v1454, %v1598
    %v1600 = vlaneseq
    %v1601 = vshrl.u32 %v1600, 7
    %v1602 = vsub.s32 0, %v1601
    %v1603 = vrot.slane %v1478, %v1602
    %v1604 = vlaneseq
    %v1605 = vshrl.u32 %v1604, 7
    %v1606 = vsub.s32 0, %v1605
    %v1607 = vrot.slane %v1492, %v1606
    %v1608 = vlaneseq
    %v1609 = vshrl.u32 %v1608, 7
    %v1610 = vsub.s32 0, %v1609
    %v1611 = vrot.slane %v1500, %v1610
    %v1612 = vlaneseq
    %v1613 = vshrl.u32 %v1612, 7
    %v1614 = vsub.s32 0, %v1613
    %v1615 = vrot.slane %v1502, %v1614
    %v1616 = vlaneseq
    %v1617 = vshrl.u32 %v1616, 7
    %v1618 = vsub.s32 0, %v1617
    %v1619 = vrot.slane %v1485, %v1618
    %v1620 = vlaneseq
    %v1621 = vshrl.u32 %v1620, 7
    %v1622 = vsub.s32 0, %v1621
    %v1623 = vrot.slane %v1499, %v1622
    %v1624 = vlaneseq
    %v1625 = vshrl.u32 %v1624, 7
    %v1626 = vsub.s32 0, %v1625
    %v1627 = vrot.slane %v1501, %v1626
    %v1628 = vlaneseq
    %v1629 = vshrl.u32 %v1628, 7
    %v1630 = vsub.s32 0, %v1629
    %v1631 = vrot.slane %v1503, %v1630
    %v1664 = vmul.f32 %v925, %v1507
    %v1665 = vmul.f32 %v927, %v1507
    %v1666 = vmul.f32 %v929, %v1507
    %v1667 = vmul.f32 %v931, %v1507
    %v1668 = vmul.f32 %v933, %v1511
    %v1669 = vmul.f32 %v935, %v1511
    %v1670 = vmul.f32 %v937, %v1511
    %v1671 = vmul.f32 %v939, %v1511
    %v1672 = vmul.f32 %v941, %v1515
    %v1673 = vmul.f32 %v943, %v1515
    %v1674 = vmul.f32 %v945, %v1515
    %v1675 = vmul.f32 %v947, %v1515
    %v1676 = vmul.f32 %v949, %v1519
    %v1677 = vmul.f32 %v951, %v1519
    %v1678 = vmul.f32 %v953, %v1519
    %v1679 = vmul.f32 %v955, %v1519
    %v1680 = vmul.f32 %v957, %v1523
    %v1681 = vmul.f32 %v959, %v1523
    %v1682 = vmul.f32 %v961, %v1523
    %v1683 = vmul.f32 %v963, %v1523
    %v1684 = vmul.f32 %v965, %v1527
    %v1685 = vmul.f32 %v967, %v1527
    %v1686 = vmul.f32 %v969, %v1527
    %v1687 = vmul.f32 %v971, %v1527
    %v1688 = vmul.f32 %v973, %v1531
    %v1689 = vmul.f32 %v975, %v1531
    %v1690 = vmul.f32 %v977, %v1531
    %v1691 = vmul.f32 %v979, %v1531
    %v1692 = vmul.f32 %v981, %v1535
    %v1693 = vmul.f32 %v983, %v1535
    %v1694 = vmul.f32 %v985, %v1535
    %v1695 = vmul.f32 %v987, %v1535
    %v1696 = vmul.f32 %v989, %v1539
    %v1697 = vmul.f32 %v991, %v1539
    %v1698 = vmul.f32 %v993, %v1539
    %v1699 = vmul.f32 %v995, %v1539
    %v1700 = vmul.f32 %v997, %v1543
    %v1701 = vmul.f32 %v999, %v1543
    %v1702 = vmul.f32 %v1001, %v1543
    %v1703 = vmul.f32 %v1003, %v1543
    %v1704 = vmul.f32 %v1005, %v1547
    %v1705 = vmul.f32 %v1007, %v1547
    %v1706 = vmul.f32 %v1009, %v1547
    %v1707 = vmul.f32 %v1011, %v1547
    %v1708 = vmul.f32 %v1013, %v1551
    %v1709 = vmul.f32 %v1015, %v1551
    %v1710 = vmul.f32 %v1017, %v1551
    %v1711 = vmul.f32 %v1019, %v1551
    %v1712 = vmul.f32 %v1021, %v1555
    %v1713 = vmul.f32 %v1023, %v1555
    %v1714 = vmul.f32 %v1025, %v1555
    %v1715 = vmul.f32 %v1027, %v1555
    %v1716 = vmul.f32 %v1029, %v1559
    %v1717 = vmul.f32 %v1031, %v1559
    %v1718 = vmul.f32 %v1033, %v1559
    %v1719 = vmul.f32 %v1035, %v1559
    %v1720 = vmul.f32 %v1037, %v1563
    %v1721 = vmul.f32 %v1039, %v1563
    %v1722 = vmul.f32 %v1041, %v1563
    %v1723 = vmul.f32 %v1043, %v1563
    %v1724 = vmul.f32 %v1045, %v1567
    %v1725 = vmul.f32 %v1047, %v1567
    %v1726 = vmul.f32 %v1049, %v1567
    %v1727 = vmul.f32 %v1051, %v1567
    %v1728 = vmul.f32 %v1053, %v1571
    %v1729 = vmul.f32 %v1055, %v1571
    %v1730 = vmul.f32 %v1057, %v1571
    %v1731 = vmul.f32 %v1059, %v1571
    %v1732 = vmul.f32 %v1061, %v1575
    %v1733 = vmul.f32 %v1063, %v1575
    %v1734 = vmul.f32 %v1065, %v1575
    %v1735 = vmul.f32 %v1067, %v1575
    %v1736 = vmul.f32 %v1069, %v1579
    %v1737 = vmul.f32 %v1071, %v1579
    %v1738 = vmul.f32 %v1073, %v1579
    %v1739 = vmul.f32 %v1075, %v1579
    %v1740 = vmul.f32 %v1077, %v1583
    %v1741 = vmul.f32 %v1079, %v1583
    %v1742 = vmul.f32 %v1081, %v1583
    %v1743 = vmul.f32 %v1083, %v1583
    %v1744 = vmul.f32 %v1085, %v1587
    %v1745 = vmul.f32 %v1087, %v1587
    %v1746 = vmul.f32 %v1089, %v1587
    %v1747 = vmul.f32 %v1091, %v1587
    %v1748 = vmul.f32 %v1093, %v1591
    %v1749 = vmul.f32 %v1095, %v1591
    %v1750 = vmul.f32 %v1097, %v1591
    %v1751 = vmul.f32 %v1099, %v1591
    %v1752 = vmul.f32 %v1101, %v1595
    %v1753 = vmul.f32 %v1103, %v1595
    %v1754 = vmul.f32 %v1105, %v1595
    %v1755 = vmul.f32 %v1107, %v1595
    %v1756 = vmul.f32 %v1109, %v1599
    %v1757 = vmul.f32 %v1111, %v1599
    %v1758 = vmul.f32 %v1113, %v1599
    %v1759 = vmul.f32 %v1115, %v1599
    %v1760 = vmul.f32 %v1117, %v1603
    %v1761 = vmul.f32 %v1119, %v1603
    %v1762 = vmul.f32 %v1121, %v1603
    %v1763 = vmul.f32 %v1123, %v1603
    %v1764 = vmul.f32 %v1125, %v1607
    %v1765 = vmul.f32 %v1127, %v1607
    %v1766 = vmul.f32 %v1129, %v1607
    %v1767 = vmul.f32 %v1131, %v1607
    %v1768 = vmul.f32 %v1133, %v1611
    %v1769 = vmul.f32 %v1135, %v1611
    %v1770 = vmul.f32 %v1137, %v1611
    %v1771 = vmul.f32 %v1139, %v1611
    %v1772 = vmul.f32 %v1141, %v1615
    %v1773 = vmul.f32 %v1143, %v1615
    %v1774 = vmul.f32 %v1145, %v1615
    %v1775 = vmul.f32 %v1147, %v1615
    %v1776 = vmul.f32 %v1149, %v1619
    %v1777 = vmul.f32 %v1151, %v1619
    %v1778 = vmul.f32 %v1153, %v1619
    %v1779 = vmul.f32 %v1155, %v1619
    %v1780 = vmul.f32 %v1157, %v1623
    %v1781 = vmul.f32 %v1159, %v1623
    %v1782 = vmul.f32 %v1161, %v1623
    %v1783 = vmul.f32 %v1163, %v1623
    %v1784 = vmul.f32 %v1165, %v1627
    %v1785 = vmul.f32 %v1167, %v1627
    %v1786 = vmul.f32 %v1169, %v1627
    %v1787 = vmul.f32 %v1171, %v1627
    %v1788 = vmul.f32 %v1173, %v1631
    %v1789 = vmul.f32 %v1175, %v1631
    %v1790 = vmul.f32 %v1177, %v1631
    %v1791 = vmul.f32 %v1179, %v1631
    %v1792 = vadd.f32 %v1664, %v1668
    %v1793 = vadd.f32 %v1792, %v1672
    %v1794 = vadd.f32 %v1793, %v1676
    %v1795 = vadd.f32 %v1794, %v1680
    %v1796 = vadd.f32 %v1795, %v1684
    %v1797 = vadd.f32 %v1796, %v1688
    %v1798 = vadd.f32 %v1797, %v1692
    %v1799 = vadd.f32 %v1798, %v1696
    %v1800 = vadd.f32 %v1799, %v1700
    %v1801 = vadd.f32 %v1800, %v1704
    %v1802 = vadd.f32 %v1801, %v1708
    %v1803 = vadd.f32 %v1802, %v1712
    %v1804 = vadd.f32 %v1803, %v1716
    %v1805 = vadd.f32 %v1804, %v1720
    %v1806 = vadd.f32 %v1805, %v1724
    %v1807 = vadd.f32 %v1806, %v1728
    %v1808 = vadd.f32 %v1807, %v1732
    %v1809 = vadd.f32 %v1808, %v1736
    %v1810 = vadd.f32 %v1809, %v1740
    %v1811 = vadd.f32 %v1810, %v1744
    %v1812 = vadd.f32 %v1811, %v1748
    %v1813 = vadd.f32 %v1812, %v1752
    %v1814 = vadd.f32 %v1813, %v1756
    %v1815 = vadd.f32 %v1814, %v1760
    %v1816 = vadd.f32 %v1815, %v1764
    %v1817 = vadd.f32 %v1816, %v1768
    %v1818 = vadd.f32 %v1817, %v1772
    %v1819 = vadd.f32 %v1818, %v1776
    %v1820 = vadd.f32 %v1819, %v1780
    %v1821 = vadd.f32 %v1820, %v1784
    %v1822 = vadd.f32 %v1821, %v1788
    %v1823 = vadd.f32 %v1665, %v1669
    %v1824 = vadd.f32 %v1823, %v1673
    %v1825 = vadd.f32 %v1824, %v1677
    %v1826 = vadd.f32 %v1825, %v1681
    %v1827 = vadd.f32 %v1826, %v1685
    %v1828 = vadd.f32 %v1827, %v1689
    %v1829 = vadd.f32 %v1828, %v1693
    %v1830 = vadd.f32 %v1829, %v1697
    %v1831 = vadd.f32 %v1830, %v1701
    %v1832 = vadd.f32 %v1831, %v1705
    %v1833 = vadd.f32 %v1832, %v1709
    %v1834 = vadd.f32 %v1833, %v1713
    %v1835 = vadd.f32 %v1834, %v1717
    %v1836 = vadd.f32 %v1835, %v1721
    %v1837 = vadd.f32 %v1836, %v1725
    %v1838 = vadd.f32 %v1837, %v1729
    %v1839 = vadd.f32 %v1838, %v1733
    %v1840 = vadd.f32 %v1839, %v1737
    %v1841 = vadd.f32 %v1840, %v1741
    %v1842 = vadd.f32 %v1841, %v1745
    %v1843 = vadd.f32 %v1842, %v1749
    %v1844 = vadd.f32 %v1843, %v1753
    %v1845 = vadd.f32 %v1844, %v1757
    %v1846 = vadd.f32 %v1845, %v1761
    %v1847 = vadd.f32 %v1846, %v1765
    %v1848 = vadd.f32 %v1847, %v1769
    %v1849 = vadd.f32 %v1848, %v1773
    %v1850 = vadd.f32 %v1849, %v1777
    %v1851 = vadd.f32 %v1850, %v1781
    %v1852 = vadd.f32 %v1851, %v1785
    %v1853 = vadd.f32 %v1852, %v1789
    %v1854 = vadd.f32 %v1666, %v1670
    %v1855 = vadd.f32 %v1854, %v1674
    %v1856 = vadd.f32 %v1855, %v1678
    %v1857 = vadd.f32 %v1856, %v1682
    %v1858 = vadd.f32 %v1857, %v1686
    %v1859 = vadd.f32 %v1858, %v1690
    %v1860 = vadd.f32 %v1859, %v1694
    %v1861 = vadd.f32 %v1860, %v1698
    %v1862 = vadd.f32 %v1861, %v1702
    %v1863 = vadd.f32 %v1862, %v1706
    %v1864 = vadd.f32 %v1863, %v1710
    %v1865 = vadd.f32 %v1864, %v1714
    %v1866 = vadd.f32 %v1865, %v1718
    %v1867 = vadd.f32 %v1866, %v1722
    %v1868 = vadd.f32 %v1867, %v1726
    %v1869 = vadd.f32 %v1868, %v1730
    %v1870 = vadd.f32 %v1869, %v1734
    %v1871 = vadd.f32 %v1870, %v1738
    %v1872 = vadd.f32 %v1871, %v1742
    %v1873 = vadd.f32 %v1872, %v1746
    %v1874 = vadd.f32 %v1873, %v1750
    %v1875 = vadd.f32 %v1874, %v1754
    %v1876 = vadd.f32 %v1875, %v1758
    %v1877 = vadd.f32 %v1876, %v1762
    %v1878 = vadd.f32 %v1877, %v1766
    %v1879 = vadd.f32 %v1878, %v1770
    %v1880 = vadd.f32 %v1879, %v1774
    %v1881 = vadd.f32 %v1880, %v1778
    %v1882 = vadd.f32 %v1881, %v1782
    %v1883 = vadd.f32 %v1882, %v1786
    %v1884 = vadd.f32 %v1883, %v1790
    %v1885 = vadd.f32 %v1667, %v1671
    %v1886 = vadd.f32 %v1885, %v1675
    %v1887 = vadd.f32 %v1886, %v1679
    %v1888 = vadd.f32 %v1887, %v1683
    %v1889 = vadd.f32 %v1888, %v1687
    %v1890 = vadd.f32 %v1889, %v1691
    %v1891 = vadd.f32 %v1890, %v1695
    %v1892 = vadd.f32 %v1891, %v1699
    %v1893 = vadd.f32 %v1892, %v1703
    %v1894 = vadd.f32 %v1893, %v1707
    %v1895 = vadd.f32 %v1894, %v1711
    %v1896 = vadd.f32 %v1895, %v1715
    %v1897 = vadd.f32 %v1896, %v1719
    %v1898 = vadd.f32 %v1897, %v1723
    %v1899 = vadd.f32 %v1898, %v1727
    %v1900 = vadd.f32 %v1899, %v1731
    %v1901 = vadd.f32 %v1900, %v1735
    %v1902 = vadd.f32 %v1901, %v1739
    %v1903 = vadd.f32 %v1902, %v1743
    %v1904 = vadd.f32 %v1903, %v1747
    %v1905 = vadd.f32 %v1904, %v1751
    %v1906 = vadd.f32 %v1905, %v1755
    %v1907 = vadd.f32 %v1906, %v1759
    %v1908 = vadd.f32 %v1907, %v1763
    %v1909 = vadd.f32 %v1908, %v1767
    %v1910 = vadd.f32 %v1909, %v1771
    %v1911 = vadd.f32 %v1910, %v1775
    %v1912 = vadd.f32 %v1911, %v1779
    %v1913 = vadd.f32 %v1912, %v1783
    %v1914 = vadd.f32 %v1913, %v1787
    %v1915 = vadd.f32 %v1914, %v1791
    %v1916 = vrcp.pop %v1210
    %v1917 = vrcp.pop %v1241
    %v1918 = vrcp.pop %v1272
    %v1919 = vrcp.pop %v1303
    %v1920 = vmul.f32 %v1822, %v1916
    %v1921 = vmul.f32 %v1853, %v1917
    %v1922 = vmul.f32 %v1884, %v1918
    %v1923 = vmul.f32 %v1915, %v1919
    %v1924 = vld [vmem:[%s1 + $0x60] sm:$0xff]
    %v1925 = vld [vmem:[%s1 + $0x68] sm:$0xff]
    %v1926 = vld [vmem:[%s1 + $0x70] sm:$0xff]
    %v1927 = vld [vmem:[%s1 + $0x78] sm:$0xff]
    %v1928 = vld [vmem:[%s2 + $0x60] sm:$0xff]
    %v1929 = vld [vmem:[%s2 + $0x68] sm:$0xff]
    %v1930 = vld [vmem:[%s2 + $0x70] sm:$0xff]
    %v1931 = vld [vmem:[%s2 + $0x78] sm:$0xff]
    %1933 = vset.pattern.permute.xlu0 0
    %1934 = vperm.xlu0 %1933, %v1928
    %v1935 = vpop.permute.xlu0 %1934
    %1938 = vset.pattern.permute.xlu0 0
    %1939 = vperm.xlu0 %1938, %v1929
    %v1940 = vpop.permute.xlu0 %1939
    %1943 = vset.pattern.permute.xlu0 0
    %1944 = vperm.xlu0 %1943, %v1930
    %v1945 = vpop.permute.xlu0 %1944
    %1948 = vset.pattern.permute.xlu0 0
    %1949 = vperm.xlu0 %1948, %v1931
    %v1950 = vpop.permute.xlu0 %1949
    %v1953 = vsel %vm108, %v1924, 0
    %v1956 = vsel %vm108, %v1925, 0
    %v1959 = vsel %vm108, %v1926, 0
    %v1962 = vsel %vm108, %v1927, 0
    %1964 = vmatprep.subr.mxu0 0.0
    %1965 = vmatpush1.msra.mxu0 %v1920
    %1966 = vmatprep.subr.mxu0 0.0
    %1967 = vmatpush1.msra.mxu0 %v1921
    %1968 = vmatprep.subr.mxu0 0.0
    %1969 = vmatpush1.msra.mxu0 %v1922
    %1970 = vmatprep.subr.mxu0 0.0
    %1971 = vmatpush1.msra.mxu0 %v1923
    %1972 = vmatprep.subr.mxu0 0.0
    %1973 = vmatpush1.msra.mxu0 0.0
    %1974 = vmatprep.subr.mxu0 0.0
    %1975 = vmatpush1.msra.mxu0 0.0
    %1976 = vmatprep.subr.mxu0 0.0
    %1977 = vmatpush1.msra.mxu0 0.0
    %1978 = vmatprep.subr.mxu0 0.0
    %1979 = vmatpush1.msra.mxu0 0.0
    %1980 = vmatprep.subr.mxu0 0.0
    %1981 = vmatpush1.msra.mxu0 0.0
    %1982 = vmatprep.subr.mxu0 0.0
    %1983 = vmatpush1.msra.mxu0 0.0
    %1984 = vmatprep.subr.mxu0 0.0
    %1985 = vmatpush1.msra.mxu0 0.0
    %1986 = vmatprep.subr.mxu0 0.0
    %1987 = vmatpush1.msra.mxu0 0.0
    %1988 = vmatprep.subr.mxu0 0.0
    %1989 = vmatpush1.msra.mxu0 0.0
    %1990 = vmatprep.subr.mxu0 0.0
    %1991 = vmatpush1.msra.mxu0 0.0
    %1992 = vmatprep.subr.mxu0 0.0
    %1993 = vmatpush1.msra.mxu0 0.0
    %1994 = vmatprep.subr.mxu0 0.0
    %1995 = vmatpush1.msra.mxu0 0.0
    %1996 = vmatprep.subr.mxu0 0.0
    %1997 = vmatpush1.msra.mxu0 0.0
    %1998 = vmatprep.subr.mxu0 0.0
    %1999 = vmatpush1.msra.mxu0 0.0
    %2000 = vmatprep.subr.mxu0 0.0
    %2001 = vmatpush1.msra.mxu0 0.0
    %2002 = vmatprep.subr.mxu0 0.0
    %2003 = vmatpush1.msra.mxu0 0.0
    %2004 = vmatprep.subr.mxu0 0.0
    %2005 = vmatpush1.msra.mxu0 0.0
    %2006 = vmatprep.subr.mxu0 0.0
    %2007 = vmatpush1.msra.mxu0 0.0
    %2008 = vmatprep.subr.mxu0 0.0
    %2009 = vmatpush1.msra.mxu0 0.0
    %2010 = vmatprep.subr.mxu0 0.0
    %2011 = vmatpush1.msra.mxu0 0.0
    %2012 = vmatprep.subr.mxu0 0.0
    %2013 = vmatpush1.msra.mxu0 0.0
    %2014 = vmatprep.subr.mxu0 0.0
    %2015 = vmatpush1.msra.mxu0 0.0
    %2016 = vmatprep.subr.mxu0 0.0
    %2017 = vmatpush1.msra.mxu0 0.0
    %2018 = vmatprep.subr.mxu0 0.0
    %2019 = vmatpush1.msra.mxu0 0.0
    %2020 = vmatprep.subr.mxu0 0.0
    %2021 = vmatpush1.msra.mxu0 0.0
    %2022 = vmatprep.subr.mxu0 0.0
    %2023 = vmatpush1.msra.mxu0 0.0
    %2024 = vmatprep.subr.mxu0 0.0
    %2025 = vmatpush1.msra.mxu0 0.0
    %2026 = vmatprep.subr.mxu0 0.0
    %2027 = vmatpush1.msra.mxu0 0.0
    %2028 = vmatprep.mubr.f32.mxu0 0.0
    %2029 = vmatmul.mubr.f32.gmra.mrb[0].mxu0 %v1953
    %v2030 = vpop.f32.mrb[0].mxu0
    %v2031 = vadd.f32 %v1935, %v2030
    %v2032 = vpop.f32.mrb[0].mxu0
    %2033 = vmatprep.mubr.f32.mxu0 0.0
    %2034 = vmatmul.mubr.f32.gmra.mrb[0].mxu0 %v1956
    %v2035 = vpop.f32.mrb[0].mxu0
    %v2036 = vadd.f32 %v1940, %v2035
    %v2037 = vpop.f32.mrb[0].mxu0
    %2038 = vmatprep.mubr.f32.mxu0 0.0
    %2039 = vmatmul.mubr.f32.gmra.mrb[0].mxu0 %v1959
    %v2040 = vpop.f32.mrb[0].mxu0
    %v2041 = vadd.f32 %v1945, %v2040
    %v2042 = vpop.f32.mrb[0].mxu0
    %2043 = vmatprep.mubr.f32.mxu0 0.0
    %2044 = vmatmul.mubr.f32.gmra.mrb[0].mxu0 %v1962
    %v2045 = vpop.f32.mrb[0].mxu0
    %v2046 = vadd.f32 %v1950, %v2045
    %v2047 = vpop.f32.mrb[0].mxu0
    %2048 = vdwg.mxu0
    %2049 = vst [vmem:[#allocation2] sm:$0xff] %v2031
    %2050 = vst [vmem:[#allocation2 + $0x8] sm:$0xff] %v2036
    %2051 = vst [vmem:[#allocation2 + $0x10] sm:$0xff] %v2041
    %2052 = vst [vmem:[#allocation2 + $0x18] sm:$0xff] %v2046
    // Predicated region
    $region14: #{tpu_custom_call.1} parent=1 // pred_check
      _
    $region15: #{tpu_custom_call.1} parent=1 // pred_check_branch
      %2054 = sbr.rel (0) target = $region17
    $region16: #{tpu_custom_call.1} parent=1 // pred_region
      %s2056 = ssub.s32 512, 512
      %2057 = vsyncadd [#allocation3], %s2056
      %s2058 = sshll.u32 [#allocation2], 4
      %s2059 = int_to_ptr.vmem [resolvable:$true] %s2058
      %2064 = dma.vmem_to_hbm [thread:$0]  %s2059, 512, %s3, [#allocation3], 128, 128, 8
    $region17: #{tpu_custom_call.1} parent=1 // pred_fallthru
      _
    // Predicated region
    $region18: #{tpu_custom_call.1} parent=1 // pred_check
      _
    $region19: #{tpu_custom_call.1} parent=1 // pred_check_branch
      %2066 = sbr.rel (0) target = $region21
    $region20: #{tpu_custom_call.1} parent=1 // pred_region
      %2067 = dma.done [#allocation3], 512
    $region21: #{tpu_custom_call.1} parent=1 // pred_fallthru
      _
    %2068 = vsyncpa [#allocation3], 1

</llo_original>
